<compile_context>
chip_gen: v7x
topology: tpu7x:2x2x1
jax: 0.10.0
libtpu: 0.0.40
codegen_flags: <defaults>
</compile_context>

<pallas_src>
import functools
import math

import jax
import jax.numpy as jnp
from jax.experimental import pallas as pl
from jax.experimental.pallas import tpu as pltpu


# Row layout of the packed per-layer bias / LayerNorm parameter block.
_ROW_BQKV, _ROW_BO, _ROW_BSO, _ROW_LN1G, _ROW_LN1B = 0, 1, 2, 3, 4
_ROW_BI, _ROW_BOUT, _ROW_LN2G, _ROW_LN2B = 5, 6, 7, 8
_PACK_ROWS = 16   # padded to a multiple of 8


# ----------------------------------------------------------------------------
# Kernel
# ----------------------------------------------------------------------------
def _activation(x, hidden_act):
    if hidden_act == 'linear':
        return x
    if hidden_act == 'relu':
        return jnp.maximum(x, 0.0)
    if hidden_act == 'tanh':
        return jnp.tanh(x)
    if hidden_act == 'gelu':
        # TODO(synk): PyTorch nn.GELU() defaults to the exact erf form; the tanh
        # approximation is used for guaranteed Mosaic lowering (~1e-3 max abs diff).
        return 0.5 * x * (1.0 + jnp.tanh(jnp.sqrt(2.0 / jnp.pi)
                                         * (x + 0.044715 * x * x * x)))
    raise ValueError('Unsupported activation: %s' % hidden_act)


def _encoder_kernel(num_heads, hidden_act,
                    # inputs
                    x_ref, mask_ref,
                    wqkv_ref, wo_ref, wso_ref, wi_ref, wout_ref, par_ref,
                    wd_ref, bd_ref,
                    # outputs
                    final_ref,
                    # scratch
                    carry_ref):
    layer = pl.program_id(1)
    B, S, H = carry_ref.shape
    dh = H // num_heads
    N = B * S
    I = wi_ref.shape[-1]
    f32, bf16 = jnp.float32, jnp.bfloat16

    # Layer 0 reads the encoder input; later layers read the VMEM-resident carry.
    @pl.when(layer == 0)
    def _():
        carry_ref[...] = x_ref[...]

    xb = carry_ref[...].reshape(N, H)        # bf16 residual stream (MXU operand)
    x32 = xb.astype(f32)                     # single upcast, reused for residual add

    p = par_ref[...]                         # (16, W) packed biases / LN params

    def row(r, width):
        return p[r:r + 1, :width]

    bo = row(_ROW_BO, H)
    b_so = row(_ROW_BSO, H)
    ln1_g, ln1_b = row(_ROW_LN1G, H), row(_ROW_LN1B, H)
    bi = row(_ROW_BI, I)
    b_out = row(_ROW_BOUT, H)
    ln2_g, ln2_b = row(_ROW_LN2G, H), row(_ROW_LN2B, H)

    def layer_norm(v, g, b):
        mu = jnp.mean(v, axis=-1, keepdims=True)
        var = jnp.mean(jnp.square(v - mu), axis=-1, keepdims=True)
        # eps matches nn.LayerNorm(hidden_size, eps=1e-12) in the reference.
        return (v - mu) * jax.lax.rsqrt(var + 1e-12) * g + b

    # ---- Multi-head self-attention (nn.MultiheadAttention, eval mode) ----
    # key_padding_mask stays (B, 1, S) and broadcasts inside the score add.
    mask = mask_ref[...].astype(f32)

    # TODO(synk): for very large num_heads under v7x's 64 MiB VMEM, convert this
    # static loop to lax.fori_loop accumulating into a VMEM scratch so only one
    # head's scores/probs are live at a time.
    ctx_heads = []
    for h in range(num_heads):
        # Per-head fused q/k/v projection via a free weight-ref view; 1/sqrt(dh)
        # is already folded into W_q / b_q by the wrapper.
        qkv = (jnp.dot(xb, wqkv_ref[h], preferred_element_type=f32)
               + p[_ROW_BQKV:_ROW_BQKV + 1, h * 3 * dh:(h + 1) * 3 * dh])
        qh = qkv[:, 0 * dh:1 * dh].reshape(B, S, dh).astype(bf16)
        kh = qkv[:, 1 * dh:2 * dh].reshape(B, S, dh).astype(bf16)
        vh = qkv[:, 2 * dh:3 * dh].reshape(B, S, dh).astype(bf16)
        scores = jnp.einsum('bqd,bkd->bqk', qh, kh,
                            preferred_element_type=f32) + mask
        m = jnp.max(scores, axis=-1, keepdims=True)
        e = jnp.exp(scores - m)
        pr = e * pl.reciprocal(jnp.sum(e, axis=-1, keepdims=True), approx=False)
        ctx_heads.append(jnp.einsum('bqk,bkd->bqd', pr.astype(bf16), vh,
                                    preferred_element_type=f32).astype(bf16))

    # Concatenate heads once, then a single full-K [N,H]@[H,H] output projection.
    ctx = jnp.concatenate(ctx_heads, axis=-1).reshape(N, H)
    attn = jnp.dot(ctx, wo_ref[...], preferred_element_type=f32) + bo

    # ---- SelfOutput: dense + dropout(id) + LayerNorm(residual) ----
    so = jnp.dot(attn.astype(bf16), wso_ref[...], preferred_element_type=f32) + b_so
    attention_output = layer_norm(so + x32, ln1_g, ln1_b)
    ao_b = attention_output.astype(bf16)     # cast once, reused for the wi matmul

    # ---- Intermediate: dense + activation ----
    it = _activation(jnp.dot(ao_b, wi_ref[...], preferred_element_type=f32) + bi,
                     hidden_act)

    # ---- Output: dense + dropout(id) + LayerNorm(residual) ----
    out = jnp.dot(it.astype(bf16), wout_ref[...], preferred_element_type=f32) + b_out
    layer_output = layer_norm(out + attention_output, ln2_g, ln2_b)
    lo_b = layer_output.astype(bf16)

    # ---- Encoder shared dense hidden -> embedding ----
    final = jnp.dot(lo_b, wd_ref[...], preferred_element_type=f32) + bd_ref[...]

    carry_ref[...] = lo_b.reshape(B, S, H)
    final_ref[...] = final.reshape(B, S, final_ref.shape[-1]).astype(final_ref.dtype)


# ----------------------------------------------------------------------------
# VMEM budgeting & tile selection
# ----------------------------------------------------------------------------
def _vmem_capacity_bytes():
    try:
        return int(pltpu.get_tpu_info().vmem_capacity_bytes)
    except Exception:
        return 64 << 20       # conservative: v7x per-core VMEM


def _footprint_bytes(bb, S, H, I, Ep, nh, pw):
    """Double-buffered streamed operands + resident carry/weights + live f32
    intermediates for one grid step."""
    f32, bf16 = 4, 2
    rows = bb * S
    dh = H // nh
    streamed = (5 * H * H + 2 * H * I) * bf16 + _PACK_ROWS * pw * f32
    io_tiles = rows * H * bf16 + bb * S * f32 + rows * Ep * bf16
    resident = H * Ep * bf16 + Ep * f32 + rows * H * bf16            # wd, bd, carry
    live = (rows * (5 * H + I + Ep) * f32 + rows * H * bf16
            + 2 * bb * S * S * f32 + rows * 3 * dh * f32)
    return 2 * (streamed + io_tiles) + resident + live


def _choose_batch_block(B, S, H, I, Ep, nh, pw, vmem_cap):
    # Larger VMEM parts (v5e/v6e, 128 MiB) get ~1024 rows/tile; 64 MiB (v7x) ~512.
    target_rows = 1024 if vmem_cap >= (96 << 20) else 512
    target_bb = max(1, target_rows // max(S, 1))
    if B >= 2:
        # Keep n_bb >= 2 so the "parallel" grid axis feeds both v7x TensorCores.
        target_bb = min(target_bb, max(1, B // 2))
    budget = int(0.8 * vmem_cap)
    divisors = [d for d in range(1, B + 1) if B % d == 0 and d <= target_bb]
    for bb in sorted(divisors, reverse=True):
        if _footprint_bytes(bb, S, H, I, Ep, nh, pw) <= budget:
            return bb
    return 1


# ----------------------------------------------------------------------------
# Parameter construction (deterministic, synthetic).
# ----------------------------------------------------------------------------
def make_params(key, config):
    H, I, E = config['hidden_size'], config['intermediate_size'], config['embedding_size']

    def nrm(k, shape):
        return (0.02 * jax.random.normal(k, shape)).astype(jnp.float32)

    layer_params = []
    for _ in range(config['num_hidden_layers']):
        keys = jax.random.split(key, 12)
        key = keys[-1]
        p = dict(
            # attention in/out projections (already transposed: y = x @ W + b)
            wq=nrm(keys[0], (H, H)), bq=nrm(keys[1], (1, H)),
            wk=nrm(keys[2], (H, H)), bk=nrm(keys[3], (1, H)),
            wv=nrm(keys[4], (H, H)), bv=nrm(keys[5], (1, H)),
            wo=nrm(keys[6], (H, H)), bo=jnp.zeros((1, H), jnp.float32),
            # SelfOutput
            w_so=nrm(keys[7], (H, H)), b_so=jnp.zeros((1, H), jnp.float32),
            ln1_g=jnp.ones((1, H), jnp.float32), ln1_b=jnp.zeros((1, H), jnp.float32),
            # Intermediate
            wi=nrm(keys[8], (H, I)), bi=jnp.zeros((1, I), jnp.float32),
            # Output
            w_out=nrm(keys[9], (I, H)), b_out=jnp.zeros((1, H), jnp.float32),
            ln2_g=jnp.ones((1, H), jnp.float32), ln2_b=jnp.zeros((1, H), jnp.float32),
        )
        layer_params.append(p)

    kd1, kd2 = jax.random.split(key)
    dense_params = dict(wd=nrm(kd1, (H, E)), bd=nrm(kd2, (1, E)))
    return layer_params, dense_params


# ----------------------------------------------------------------------------
# Encoder forward (PyTorch convention: hidden_states is [src_len, batch, hidden])
# ----------------------------------------------------------------------------
def encoder_forward(hidden_states, attention_mask, layer_params, dense_params, config):
    S, B, H = hidden_states.shape
    L = config['num_hidden_layers']
    E = config['embedding_size']
    I = config['intermediate_size']
    nh = config['num_attention_heads']
    assert H % nh == 0
    dh = H // nh
    scale = 1.0 / math.sqrt(dh)
    f32, bf16 = jnp.float32, jnp.bfloat16

    # [src_len, batch, H] -> [batch, src_len, H]; bf16 residual stream.
    x = jnp.transpose(hidden_states, (1, 0, 2)).astype(bf16)
    if attention_mask is None:
        mask = jnp.zeros((B, 1, S), f32)
    else:
        # key_padding_mask semantics: True == pad / masked key.
        mask = jnp.where(attention_mask, -1e9, 0.0).astype(f32).reshape(B, 1, S)

    # ---- per-head q/k/v weights: (L, nh, H, 3*dh), 1/sqrt(dh) folded into q ----
    def qkv_per_head(p):
        wq = (p['wq'] * scale).reshape(H, nh, dh)
        wk = p['wk'].reshape(H, nh, dh)
        wv = p['wv'].reshape(H, nh, dh)
        w = jnp.stack([wq, wk, wv], axis=2)                # (H, nh, 3, dh)
        return jnp.transpose(w, (1, 0, 2, 3)).reshape(nh, H, 3 * dh)

    wqkv = jnp.stack([qkv_per_head(p) for p in layer_params]).astype(bf16)

    def stack_w(name):
        return jnp.stack([p[name] for p in layer_params]).astype(bf16)

    w_o, w_so = stack_w('wo'), stack_w('w_so')
    w_i, w_out = stack_w('wi'), stack_w('w_out')

    # ---- packed small per-layer params: (L, 16, pw) f32 (one DMA per step) ----
    pw = max(3 * H, I, H)

    def pack(p):
        bqkv = jnp.stack([p['bq'].reshape(nh, dh) * scale,
                          p['bk'].reshape(nh, dh),
                          p['bv'].reshape(nh, dh)], axis=1).reshape(3 * H)
        rows = {_ROW_BQKV: bqkv, _ROW_BO: p['bo'], _ROW_BSO: p['b_so'],
                _ROW_LN1G: p['ln1_g'], _ROW_LN1B: p['ln1_b'], _ROW_BI: p['bi'],
                _ROW_BOUT: p['b_out'], _ROW_LN2G: p['ln2_g'], _ROW_LN2B: p['ln2_b']}
        buf = jnp.zeros((_PACK_ROWS, pw), f32)
        for r, v in rows.items():
            v = v.reshape(-1).astype(f32)
            buf = buf.at[r, :v.shape[0]].set(v)
        return buf

    params = jnp.stack([pack(p) for p in layer_params])

    # ---- shared hidden -> embedding; lane-pad only when E >= 128 ----
    Ep = E if (E < 128 or E % 128 == 0) else ((E + 127) // 128) * 128
    wd = jnp.zeros((H, Ep), bf16).at[:, :E].set(dense_params['wd'].astype(bf16))
    bd = jnp.zeros((1, Ep), f32).at[:, :E].set(dense_params['bd'].astype(f32))

    vmem_cap = _vmem_capacity_bytes()
    bb = _choose_batch_block(B, S, H, I, Ep, nh, pw, vmem_cap)
    n_bb = B // bb
    grid = (n_bb, L)

    vmem_limit = int(min(max(1.25 * _footprint_bytes(bb, S, H, I, Ep, nh, pw),
                             32 << 20),
                         0.85 * vmem_cap))

    # TODO(synk): for tiny models whose full L-layer weight stack fits in VMEM,
    # a constant-index full-L weight BlockSpec would avoid re-streaming weights
    # across batch blocks entirely.
    in_specs = [
        pl.BlockSpec((bb, S, H), lambda gb, gl: (gb, 0, 0)),                 # x
        pl.BlockSpec((bb, 1, S), lambda gb, gl: (gb, 0, 0)),                 # mask
        pl.BlockSpec((None, nh, H, 3 * dh), lambda gb, gl: (gl, 0, 0, 0)),   # wqkv
        pl.BlockSpec((None, H, H), lambda gb, gl: (gl, 0, 0)),               # wo
        pl.BlockSpec((None, H, H), lambda gb, gl: (gl, 0, 0)),               # w_so
        pl.BlockSpec((None, H, I), lambda gb, gl: (gl, 0, 0)),               # wi
        pl.BlockSpec((None, I, H), lambda gb, gl: (gl, 0, 0)),               # w_out
        pl.BlockSpec((None, _PACK_ROWS, pw), lambda gb, gl: (gl, 0, 0)),     # params
        pl.BlockSpec((H, Ep), lambda gb, gl: (0, 0)),                        # wd
        pl.BlockSpec((1, Ep), lambda gb, gl: (0, 0)),                        # bd
    ]
    out_specs = pl.BlockSpec((None, bb, S, Ep), lambda gb, gl: (gl, gb, 0, 0))
    out_shape = jax.ShapeDtypeStruct((L, B, S, Ep), bf16)    # bf16 HBM writeback

    kernel = functools.partial(_encoder_kernel, nh, config['hidden_act'])
    final = pl.pallas_call(
        kernel,
        grid=grid,
        in_specs=in_specs,
        out_specs=out_specs,
        out_shape=out_shape,
        scratch_shapes=[pltpu.VMEM((bb, S, H), bf16)],       # bf16 residual carry
        compiler_params=pltpu.CompilerParams(
            dimension_semantics=("parallel", "arbitrary"),
            vmem_limit_bytes=vmem_limit),
    )(x, mask, wqkv, w_o, w_so, w_i, w_out, params, wd, bd)

    # [L, B, S, Ep] bf16 -> list of [src_len, batch, embedding_size] f32 per layer.
    return [jnp.transpose(final[i, :, :, :E].astype(f32), (1, 0, 2))
            for i in range(L)]


if __name__ == "__main__":
    config = dict(
        hidden_size=32,
        num_attention_heads=4,
        intermediate_size=64,
        num_hidden_layers=2,
        embedding_size=16,
        hidden_act='gelu',
        hidden_dropout_prob=0.1,   # inference: dropout is identity
    )

    key = jax.random.PRNGKey(0)
    k_params, k_x = jax.random.split(key)
    layer_params, dense_params = make_params(k_params, config)

    S, B, H = 8, 2, config['hidden_size']
    hidden_states = jax.random.normal(k_x, (S, B, H), dtype=jnp.float32)

    outs = encoder_forward(hidden_states, None, layer_params, dense_params, config)
    for o in outs:
        jax.block_until_ready(o)
        assert o.shape == (S, B, config['embedding_size'])
        assert bool(jnp.all(jnp.isfinite(o)))
    print("KERNEL_OK")
</pallas_src>

<mosaic_0001>
module attributes {stable_mosaic.version = 11 : i64} {
  func.func @_encoder_kernel(%arg0: i32, %arg1: i32, %arg2: memref<1x8x32xbf16, #tpu.memory_space<vmem>>, %arg3: memref<1x1x8xf32, #tpu.memory_space<vmem>>, %arg4: memref<1x4x32x24xbf16, #tpu.memory_space<vmem>>, %arg5: memref<1x32x32xbf16, #tpu.memory_space<vmem>>, %arg6: memref<1x32x32xbf16, #tpu.memory_space<vmem>>, %arg7: memref<1x32x64xbf16, #tpu.memory_space<vmem>>, %arg8: memref<1x64x32xbf16, #tpu.memory_space<vmem>>, %arg9: memref<1x16x96xf32, #tpu.memory_space<vmem>>, %arg10: memref<32x16xbf16, #tpu.memory_space<vmem>>, %arg11: memref<1x16xf32, #tpu.memory_space<vmem>>, %arg12: memref<1x1x8x16xbf16, #tpu.memory_space<vmem>>, %arg13: memref<1x8x32xbf16, #tpu.memory_space<vmem>>) attributes {dimension_semantics = [#tpu.dimension_semantics<parallel>, #tpu.dimension_semantics<arbitrary>], iteration_bounds = array<i64: 2, 2>, scalar_prefetch = 0 : i64, scratch_operands = 1 : i64, tpu.core_type = #tpu.core_type<tc>, window_params = [{transform_indices = @transform_0, window_bounds = array<i64: 1, 8, 32>}, {transform_indices = @transform_1, window_bounds = array<i64: 1, 1, 8>}, {transform_indices = @transform_2, window_bounds = array<i64: 1, 4, 32, 24>}, {transform_indices = @transform_3, window_bounds = array<i64: 1, 32, 32>}, {transform_indices = @transform_4, window_bounds = array<i64: 1, 32, 32>}, {transform_indices = @transform_5, window_bounds = array<i64: 1, 32, 64>}, {transform_indices = @transform_6, window_bounds = array<i64: 1, 64, 32>}, {transform_indices = @transform_7, window_bounds = array<i64: 1, 16, 96>}, {pipeline_mode = #tpu.pipeline_mode<synchronous>, transform_indices = @transform_8, window_bounds = array<i64: 32, 16>}, {pipeline_mode = #tpu.pipeline_mode<synchronous>, transform_indices = @transform_9, window_bounds = array<i64: 1, 16>}, {transform_indices = @transform_10, window_bounds = array<i64: 1, 1, 8, 16>}]} {
    %c0_i32 = arith.constant 0 : i32
    %0 = arith.cmpi eq, %arg1, %c0_i32 : i32
    %1 = arith.extui %0 : i1 to i32
    %c0_i32_0 = arith.constant 0 : i32
    %2 = arith.cmpi ne, %1, %c0_i32_0 : i32
    scf.if %2 {
      %c0_83 = arith.constant 0 : index
      %c0_84 = arith.constant 0 : index
      %c0_85 = arith.constant 0 : index
      %239 = vector.load %arg2[%c0_83, %c0_84, %c0_85] : memref<1x8x32xbf16, #tpu.memory_space<vmem>>, vector<1x8x32xbf16>
      %c0_86 = arith.constant 0 : index
      %c0_87 = arith.constant 0 : index
      %c0_88 = arith.constant 0 : index
      %240 = vector.load %arg13[%c0_86, %c0_87, %c0_88] : memref<1x8x32xbf16, #tpu.memory_space<vmem>>, vector<1x8x32xbf16>
      tpu.vector_store %arg13[%c0_86, %c0_87, %c0_88], %239 {strides = array<i32>} : memref<1x8x32xbf16, #tpu.memory_space<vmem>>, vector<1x8x32xbf16>,
    } else {
    }
    %c0 = arith.constant 0 : index
    %c0_1 = arith.constant 0 : index
    %c0_2 = arith.constant 0 : index
    %3 = vector.load %arg13[%c0, %c0_1, %c0_2] : memref<1x8x32xbf16, #tpu.memory_space<vmem>>, vector<1x8x32xbf16>
    %4 = vector.shape_cast %3 : vector<1x8x32xbf16> to vector<8x32xbf16>
    %5 = arith.extf %4 : vector<8x32xbf16> to vector<8x32xf32>
    %c0_3 = arith.constant 0 : index
    %c0_4 = arith.constant 0 : index
    %c0_5 = arith.constant 0 : index
    %6 = vector.load %arg9[%c0_3, %c0_4, %c0_5] : memref<1x16x96xf32, #tpu.memory_space<vmem>>, vector<1x16x96xf32>
    %7 = vector.shape_cast %6 : vector<1x16x96xf32> to vector<16x96xf32>
    %8 = vector.extract_strided_slice %7 {offsets = [1, 0], sizes = [1, 32], strides = [1, 1]} : vector<16x96xf32> to vector<1x32xf32>
    %9 = vector.extract_strided_slice %7 {offsets = [2, 0], sizes = [1, 32], strides = [1, 1]} : vector<16x96xf32> to vector<1x32xf32>
    %10 = vector.extract_strided_slice %7 {offsets = [3, 0], sizes = [1, 32], strides = [1, 1]} : vector<16x96xf32> to vector<1x32xf32>
    %11 = vector.extract_strided_slice %7 {offsets = [4, 0], sizes = [1, 32], strides = [1, 1]} : vector<16x96xf32> to vector<1x32xf32>
    %12 = vector.extract_strided_slice %7 {offsets = [5, 0], sizes = [1, 64], strides = [1, 1]} : vector<16x96xf32> to vector<1x64xf32>
    %13 = vector.extract_strided_slice %7 {offsets = [6, 0], sizes = [1, 32], strides = [1, 1]} : vector<16x96xf32> to vector<1x32xf32>
    %14 = vector.extract_strided_slice %7 {offsets = [7, 0], sizes = [1, 32], strides = [1, 1]} : vector<16x96xf32> to vector<1x32xf32>
    %15 = vector.extract_strided_slice %7 {offsets = [8, 0], sizes = [1, 32], strides = [1, 1]} : vector<16x96xf32> to vector<1x32xf32>
    %c0_6 = arith.constant 0 : index
    %c0_7 = arith.constant 0 : index
    %c0_8 = arith.constant 0 : index
    %16 = vector.load %arg3[%c0_6, %c0_7, %c0_8] : memref<1x1x8xf32, #tpu.memory_space<vmem>>, vector<1x1x8xf32>
    %c0_9 = arith.constant 0 : index
    %c0_10 = arith.constant 0 : index
    %c0_11 = arith.constant 0 : index
    %c0_12 = arith.constant 0 : index
    %17 = vector.load %arg4[%c0_9, %c0_10, %c0_11, %c0_12] : memref<1x4x32x24xbf16, #tpu.memory_space<vmem>>, vector<1x1x32x24xbf16>
    %18 = vector.shape_cast %17 : vector<1x1x32x24xbf16> to vector<32x24xbf16>
    %cst = arith.constant dense<0.000000e+00> : vector<8x24xf32>
    %19 = tpu.matmul %4, %18, %cst {dimension_numbers = #tpu.dot_dimension_numbers<[1], [0], [0], [1], [0, 0, 1, 1], [], []>} : vector<8x32xbf16>, vector<32x24xbf16>, vector<8x24xf32> -> vector<8x24xf32>
    %20 = vector.extract_strided_slice %7 {offsets = [0, 0], sizes = [1, 24], strides = [1, 1]} : vector<16x96xf32> to vector<1x24xf32>
    %21 = vector.broadcast %20 : vector<1x24xf32> to vector<8x24xf32>
    %22 = arith.addf %19, %21 : vector<8x24xf32>
    %23 = vector.extract_strided_slice %22 {offsets = [0, 0], sizes = [8, 8], strides = [1, 1]} : vector<8x24xf32> to vector<8x8xf32>
    %24 = vector.shape_cast %23 : vector<8x8xf32> to vector<1x8x8xf32>
    %25 = arith.truncf %24 : vector<1x8x8xf32> to vector<1x8x8xbf16>
    %26 = vector.extract_strided_slice %22 {offsets = [0, 8], sizes = [8, 8], strides = [1, 1]} : vector<8x24xf32> to vector<8x8xf32>
    %27 = vector.shape_cast %26 : vector<8x8xf32> to vector<1x8x8xf32>
    %28 = arith.truncf %27 : vector<1x8x8xf32> to vector<1x8x8xbf16>
    %29 = vector.extract_strided_slice %22 {offsets = [0, 16], sizes = [8, 8], strides = [1, 1]} : vector<8x24xf32> to vector<8x8xf32>
    %30 = vector.shape_cast %29 : vector<8x8xf32> to vector<1x8x8xf32>
    %31 = arith.truncf %30 : vector<1x8x8xf32> to vector<1x8x8xbf16>
    "tpu.trace_start"() <{level = 10 : i32, message = "bqd,bkd->bqk"}> : () -> ()
    %cst_13 = arith.constant dense<0.000000e+00> : vector<1x8x8xf32>
    %32 = tpu.matmul %25, %28, %cst_13 {dimension_numbers = #tpu.dot_dimension_numbers<[2], [2], [1], [1], [0, 0, 0, 1, 1, 1], [0], [0]>} : vector<1x8x8xbf16>, vector<1x8x8xbf16>, vector<1x8x8xf32> -> vector<1x8x8xf32>
    "tpu.trace_stop"() : () -> ()
    %33 = vector.broadcast %16 : vector<1x1x8xf32> to vector<1x8x8xf32>
    %34 = arith.addf %32, %33 : vector<1x8x8xf32>
    %cst_14 = arith.constant dense<0xFF800000> : vector<1x8xf32>
    %35 = vector.multi_reduction <maximumf>, %34, %cst_14 [2] : vector<1x8x8xf32> to vector<1x8xf32>
    %36 = vector.shape_cast %35 : vector<1x8xf32> to vector<1x8x1xf32>
    %37 = vector.broadcast %36 : vector<1x8x1xf32> to vector<1x8x8xf32>
    %38 = arith.subf %34, %37 : vector<1x8x8xf32>
    %39 = math.exp %38 : vector<1x8x8xf32>
    %cst_15 = arith.constant dense<0.000000e+00> : vector<1x8xf32>
    %40 = vector.multi_reduction <add>, %39, %cst_15 [2] : vector<1x8x8xf32> to vector<1x8xf32>
    %41 = vector.shape_cast %40 : vector<1x8xf32> to vector<1x8x1xf32>
    %42 = tpu.reciprocal %41 : vector<1x8x1xf32> -> vector<1x8x1xf32>
    %43 = vector.broadcast %42 : vector<1x8x1xf32> to vector<1x8x8xf32>
    %44 = arith.mulf %39, %43 : vector<1x8x8xf32>
    %45 = arith.truncf %44 : vector<1x8x8xf32> to vector<1x8x8xbf16>
    "tpu.trace_start"() <{level = 10 : i32, message = "bqk,bkd->bqd"}> : () -> ()
    %cst_16 = arith.constant dense<0.000000e+00> : vector<1x8x8xf32>
    %46 = tpu.matmul %45, %31, %cst_16 {dimension_numbers = #tpu.dot_dimension_numbers<[2], [1], [1], [2], [0, 0, 0, 1, 1, 2], [0], [0]>} : vector<1x8x8xbf16>, vector<1x8x8xbf16>, vector<1x8x8xf32> -> vector<1x8x8xf32>
    "tpu.trace_stop"() : () -> ()
    %47 = arith.truncf %46 : vector<1x8x8xf32> to vector<1x8x8xbf16>
    %c0_17 = arith.constant 0 : index
    %c1 = arith.constant 1 : index
    %c0_18 = arith.constant 0 : index
    %c0_19 = arith.constant 0 : index
    %48 = vector.load %arg4[%c0_17, %c1, %c0_18, %c0_19] : memref<1x4x32x24xbf16, #tpu.memory_space<vmem>>, vector<1x1x32x24xbf16>
    %49 = vector.shape_cast %48 : vector<1x1x32x24xbf16> to vector<32x24xbf16>
    %cst_20 = arith.constant dense<0.000000e+00> : vector<8x24xf32>
    %50 = tpu.matmul %4, %49, %cst_20 {dimension_numbers = #tpu.dot_dimension_numbers<[1], [0], [0], [1], [0, 0, 1, 1], [], []>} : vector<8x32xbf16>, vector<32x24xbf16>, vector<8x24xf32> -> vector<8x24xf32>
    %51 = vector.extract_strided_slice %7 {offsets = [0, 24], sizes = [1, 24], strides = [1, 1]} : vector<16x96xf32> to vector<1x24xf32>
    %52 = vector.broadcast %51 : vector<1x24xf32> to vector<8x24xf32>
    %53 = arith.addf %50, %52 : vector<8x24xf32>
    %54 = vector.extract_strided_slice %53 {offsets = [0, 0], sizes = [8, 8], strides = [1, 1]} : vector<8x24xf32> to vector<8x8xf32>
    %55 = vector.shape_cast %54 : vector<8x8xf32> to vector<1x8x8xf32>
    %56 = arith.truncf %55 : vector<1x8x8xf32> to vector<1x8x8xbf16>
    %57 = vector.extract_strided_slice %53 {offsets = [0, 8], sizes = [8, 8], strides = [1, 1]} : vector<8x24xf32> to vector<8x8xf32>
    %58 = vector.shape_cast %57 : vector<8x8xf32> to vector<1x8x8xf32>
    %59 = arith.truncf %58 : vector<1x8x8xf32> to vector<1x8x8xbf16>
    %60 = vector.extract_strided_slice %53 {offsets = [0, 16], sizes = [8, 8], strides = [1, 1]} : vector<8x24xf32> to vector<8x8xf32>
    %61 = vector.shape_cast %60 : vector<8x8xf32> to vector<1x8x8xf32>
    %62 = arith.truncf %61 : vector<1x8x8xf32> to vector<1x8x8xbf16>
    "tpu.trace_start"() <{level = 10 : i32, message = "bqd,bkd->bqk"}> : () -> ()
    %cst_21 = arith.constant dense<0.000000e+00> : vector<1x8x8xf32>
    %63 = tpu.matmul %56, %59, %cst_21 {dimension_numbers = #tpu.dot_dimension_numbers<[2], [2], [1], [1], [0, 0, 0, 1, 1, 1], [0], [0]>} : vector<1x8x8xbf16>, vector<1x8x8xbf16>, vector<1x8x8xf32> -> vector<1x8x8xf32>
    "tpu.trace_stop"() : () -> ()
    %64 = vector.broadcast %16 : vector<1x1x8xf32> to vector<1x8x8xf32>
    %65 = arith.addf %63, %64 : vector<1x8x8xf32>
    %cst_22 = arith.constant dense<0xFF800000> : vector<1x8xf32>
    %66 = vector.multi_reduction <maximumf>, %65, %cst_22 [2] : vector<1x8x8xf32> to vector<1x8xf32>
    %67 = vector.shape_cast %66 : vector<1x8xf32> to vector<1x8x1xf32>
    %68 = vector.broadcast %67 : vector<1x8x1xf32> to vector<1x8x8xf32>
    %69 = arith.subf %65, %68 : vector<1x8x8xf32>
    %70 = math.exp %69 : vector<1x8x8xf32>
    %cst_23 = arith.constant dense<0.000000e+00> : vector<1x8xf32>
    %71 = vector.multi_reduction <add>, %70, %cst_23 [2] : vector<1x8x8xf32> to vector<1x8xf32>
    %72 = vector.shape_cast %71 : vector<1x8xf32> to vector<1x8x1xf32>
    %73 = tpu.reciprocal %72 : vector<1x8x1xf32> -> vector<1x8x1xf32>
    %74 = vector.broadcast %73 : vector<1x8x1xf32> to vector<1x8x8xf32>
    %75 = arith.mulf %70, %74 : vector<1x8x8xf32>
    %76 = arith.truncf %75 : vector<1x8x8xf32> to vector<1x8x8xbf16>
    "tpu.trace_start"() <{level = 10 : i32, message = "bqk,bkd->bqd"}> : () -> ()
    %cst_24 = arith.constant dense<0.000000e+00> : vector<1x8x8xf32>
    %77 = tpu.matmul %76, %62, %cst_24 {dimension_numbers = #tpu.dot_dimension_numbers<[2], [1], [1], [2], [0, 0, 0, 1, 1, 2], [0], [0]>} : vector<1x8x8xbf16>, vector<1x8x8xbf16>, vector<1x8x8xf32> -> vector<1x8x8xf32>
    "tpu.trace_stop"() : () -> ()
    %78 = arith.truncf %77 : vector<1x8x8xf32> to vector<1x8x8xbf16>
    %c0_25 = arith.constant 0 : index
    %c2 = arith.constant 2 : index
    %c0_26 = arith.constant 0 : index
    %c0_27 = arith.constant 0 : index
    %79 = vector.load %arg4[%c0_25, %c2, %c0_26, %c0_27] : memref<1x4x32x24xbf16, #tpu.memory_space<vmem>>, vector<1x1x32x24xbf16>
    %80 = vector.shape_cast %79 : vector<1x1x32x24xbf16> to vector<32x24xbf16>
    %cst_28 = arith.constant dense<0.000000e+00> : vector<8x24xf32>
    %81 = tpu.matmul %4, %80, %cst_28 {dimension_numbers = #tpu.dot_dimension_numbers<[1], [0], [0], [1], [0, 0, 1, 1], [], []>} : vector<8x32xbf16>, vector<32x24xbf16>, vector<8x24xf32> -> vector<8x24xf32>
    %82 = vector.extract_strided_slice %7 {offsets = [0, 48], sizes = [1, 24], strides = [1, 1]} : vector<16x96xf32> to vector<1x24xf32>
    %83 = vector.broadcast %82 : vector<1x24xf32> to vector<8x24xf32>
    %84 = arith.addf %81, %83 : vector<8x24xf32>
    %85 = vector.extract_strided_slice %84 {offsets = [0, 0], sizes = [8, 8], strides = [1, 1]} : vector<8x24xf32> to vector<8x8xf32>
    %86 = vector.shape_cast %85 : vector<8x8xf32> to vector<1x8x8xf32>
    %87 = arith.truncf %86 : vector<1x8x8xf32> to vector<1x8x8xbf16>
    %88 = vector.extract_strided_slice %84 {offsets = [0, 8], sizes = [8, 8], strides = [1, 1]} : vector<8x24xf32> to vector<8x8xf32>
    %89 = vector.shape_cast %88 : vector<8x8xf32> to vector<1x8x8xf32>
    %90 = arith.truncf %89 : vector<1x8x8xf32> to vector<1x8x8xbf16>
    %91 = vector.extract_strided_slice %84 {offsets = [0, 16], sizes = [8, 8], strides = [1, 1]} : vector<8x24xf32> to vector<8x8xf32>
    %92 = vector.shape_cast %91 : vector<8x8xf32> to vector<1x8x8xf32>
    %93 = arith.truncf %92 : vector<1x8x8xf32> to vector<1x8x8xbf16>
    "tpu.trace_start"() <{level = 10 : i32, message = "bqd,bkd->bqk"}> : () -> ()
    %cst_29 = arith.constant dense<0.000000e+00> : vector<1x8x8xf32>
    %94 = tpu.matmul %87, %90, %cst_29 {dimension_numbers = #tpu.dot_dimension_numbers<[2], [2], [1], [1], [0, 0, 0, 1, 1, 1], [0], [0]>} : vector<1x8x8xbf16>, vector<1x8x8xbf16>, vector<1x8x8xf32> -> vector<1x8x8xf32>
    "tpu.trace_stop"() : () -> ()
    %95 = vector.broadcast %16 : vector<1x1x8xf32> to vector<1x8x8xf32>
    %96 = arith.addf %94, %95 : vector<1x8x8xf32>
    %cst_30 = arith.constant dense<0xFF800000> : vector<1x8xf32>
    %97 = vector.multi_reduction <maximumf>, %96, %cst_30 [2] : vector<1x8x8xf32> to vector<1x8xf32>
    %98 = vector.shape_cast %97 : vector<1x8xf32> to vector<1x8x1xf32>
    %99 = vector.broadcast %98 : vector<1x8x1xf32> to vector<1x8x8xf32>
    %100 = arith.subf %96, %99 : vector<1x8x8xf32>
    %101 = math.exp %100 : vector<1x8x8xf32>
    %cst_31 = arith.constant dense<0.000000e+00> : vector<1x8xf32>
    %102 = vector.multi_reduction <add>, %101, %cst_31 [2] : vector<1x8x8xf32> to vector<1x8xf32>
    %103 = vector.shape_cast %102 : vector<1x8xf32> to vector<1x8x1xf32>
    %104 = tpu.reciprocal %103 : vector<1x8x1xf32> -> vector<1x8x1xf32>
    %105 = vector.broadcast %104 : vector<1x8x1xf32> to vector<1x8x8xf32>
    %106 = arith.mulf %101, %105 : vector<1x8x8xf32>
    %107 = arith.truncf %106 : vector<1x8x8xf32> to vector<1x8x8xbf16>
    "tpu.trace_start"() <{level = 10 : i32, message = "bqk,bkd->bqd"}> : () -> ()
    %cst_32 = arith.constant dense<0.000000e+00> : vector<1x8x8xf32>
    %108 = tpu.matmul %107, %93, %cst_32 {dimension_numbers = #tpu.dot_dimension_numbers<[2], [1], [1], [2], [0, 0, 0, 1, 1, 2], [0], [0]>} : vector<1x8x8xbf16>, vector<1x8x8xbf16>, vector<1x8x8xf32> -> vector<1x8x8xf32>
    "tpu.trace_stop"() : () -> ()
    %109 = arith.truncf %108 : vector<1x8x8xf32> to vector<1x8x8xbf16>
    %c0_33 = arith.constant 0 : index
    %c3 = arith.constant 3 : index
    %c0_34 = arith.constant 0 : index
    %c0_35 = arith.constant 0 : index
    %110 = vector.load %arg4[%c0_33, %c3, %c0_34, %c0_35] : memref<1x4x32x24xbf16, #tpu.memory_space<vmem>>, vector<1x1x32x24xbf16>
    %111 = vector.shape_cast %110 : vector<1x1x32x24xbf16> to vector<32x24xbf16>
    %cst_36 = arith.constant dense<0.000000e+00> : vector<8x24xf32>
    %112 = tpu.matmul %4, %111, %cst_36 {dimension_numbers = #tpu.dot_dimension_numbers<[1], [0], [0], [1], [0, 0, 1, 1], [], []>} : vector<8x32xbf16>, vector<32x24xbf16>, vector<8x24xf32> -> vector<8x24xf32>
    %113 = vector.extract_strided_slice %7 {offsets = [0, 72], sizes = [1, 24], strides = [1, 1]} : vector<16x96xf32> to vector<1x24xf32>
    %114 = vector.broadcast %113 : vector<1x24xf32> to vector<8x24xf32>
    %115 = arith.addf %112, %114 : vector<8x24xf32>
    %116 = vector.extract_strided_slice %115 {offsets = [0, 0], sizes = [8, 8], strides = [1, 1]} : vector<8x24xf32> to vector<8x8xf32>
    %117 = vector.shape_cast %116 : vector<8x8xf32> to vector<1x8x8xf32>
    %118 = arith.truncf %117 : vector<1x8x8xf32> to vector<1x8x8xbf16>
    %119 = vector.extract_strided_slice %115 {offsets = [0, 8], sizes = [8, 8], strides = [1, 1]} : vector<8x24xf32> to vector<8x8xf32>
    %120 = vector.shape_cast %119 : vector<8x8xf32> to vector<1x8x8xf32>
    %121 = arith.truncf %120 : vector<1x8x8xf32> to vector<1x8x8xbf16>
    %122 = vector.extract_strided_slice %115 {offsets = [0, 16], sizes = [8, 8], strides = [1, 1]} : vector<8x24xf32> to vector<8x8xf32>
    %123 = vector.shape_cast %122 : vector<8x8xf32> to vector<1x8x8xf32>
    %124 = arith.truncf %123 : vector<1x8x8xf32> to vector<1x8x8xbf16>
    "tpu.trace_start"() <{level = 10 : i32, message = "bqd,bkd->bqk"}> : () -> ()
    %cst_37 = arith.constant dense<0.000000e+00> : vector<1x8x8xf32>
    %125 = tpu.matmul %118, %121, %cst_37 {dimension_numbers = #tpu.dot_dimension_numbers<[2], [2], [1], [1], [0, 0, 0, 1, 1, 1], [0], [0]>} : vector<1x8x8xbf16>, vector<1x8x8xbf16>, vector<1x8x8xf32> -> vector<1x8x8xf32>
    "tpu.trace_stop"() : () -> ()
    %126 = vector.broadcast %16 : vector<1x1x8xf32> to vector<1x8x8xf32>
    %127 = arith.addf %125, %126 : vector<1x8x8xf32>
    %cst_38 = arith.constant dense<0xFF800000> : vector<1x8xf32>
    %128 = vector.multi_reduction <maximumf>, %127, %cst_38 [2] : vector<1x8x8xf32> to vector<1x8xf32>
    %129 = vector.shape_cast %128 : vector<1x8xf32> to vector<1x8x1xf32>
    %130 = vector.broadcast %129 : vector<1x8x1xf32> to vector<1x8x8xf32>
    %131 = arith.subf %127, %130 : vector<1x8x8xf32>
    %132 = math.exp %131 : vector<1x8x8xf32>
    %cst_39 = arith.constant dense<0.000000e+00> : vector<1x8xf32>
    %133 = vector.multi_reduction <add>, %132, %cst_39 [2] : vector<1x8x8xf32> to vector<1x8xf32>
    %134 = vector.shape_cast %133 : vector<1x8xf32> to vector<1x8x1xf32>
    %135 = tpu.reciprocal %134 : vector<1x8x1xf32> -> vector<1x8x1xf32>
    %136 = vector.broadcast %135 : vector<1x8x1xf32> to vector<1x8x8xf32>
    %137 = arith.mulf %132, %136 : vector<1x8x8xf32>
    %138 = arith.truncf %137 : vector<1x8x8xf32> to vector<1x8x8xbf16>
    "tpu.trace_start"() <{level = 10 : i32, message = "bqk,bkd->bqd"}> : () -> ()
    %cst_40 = arith.constant dense<0.000000e+00> : vector<1x8x8xf32>
    %139 = tpu.matmul %138, %124, %cst_40 {dimension_numbers = #tpu.dot_dimension_numbers<[2], [1], [1], [2], [0, 0, 0, 1, 1, 2], [0], [0]>} : vector<1x8x8xbf16>, vector<1x8x8xbf16>, vector<1x8x8xf32> -> vector<1x8x8xf32>
    "tpu.trace_stop"() : () -> ()
    %140 = arith.truncf %139 : vector<1x8x8xf32> to vector<1x8x8xbf16>
    %141 = tpu.concatenate %47, %78, %109, %140 in 2 : vector<1x8x8xbf16>, vector<1x8x8xbf16>, vector<1x8x8xbf16>, vector<1x8x8xbf16> -> vector<1x8x32xbf16>
    %142 = vector.shape_cast %141 : vector<1x8x32xbf16> to vector<8x32xbf16>
    %c0_41 = arith.constant 0 : index
    %c0_42 = arith.constant 0 : index
    %c0_43 = arith.constant 0 : index
    %143 = vector.load %arg5[%c0_41, %c0_42, %c0_43] : memref<1x32x32xbf16, #tpu.memory_space<vmem>>, vector<1x32x32xbf16>
    %144 = vector.shape_cast %143 : vector<1x32x32xbf16> to vector<32x32xbf16>
    %cst_44 = arith.constant dense<0.000000e+00> : vector<8x32xf32>
    %145 = tpu.matmul %142, %144, %cst_44 {dimension_numbers = #tpu.dot_dimension_numbers<[1], [0], [0], [1], [0, 0, 1, 1], [], []>} : vector<8x32xbf16>, vector<32x32xbf16>, vector<8x32xf32> -> vector<8x32xf32>
    %146 = vector.broadcast %8 : vector<1x32xf32> to vector<8x32xf32>
    %147 = arith.addf %145, %146 : vector<8x32xf32>
    %148 = arith.truncf %147 : vector<8x32xf32> to vector<8x32xbf16>
    %c0_45 = arith.constant 0 : index
    %c0_46 = arith.constant 0 : index
    %c0_47 = arith.constant 0 : index
    %149 = vector.load %arg6[%c0_45, %c0_46, %c0_47] : memref<1x32x32xbf16, #tpu.memory_space<vmem>>, vector<1x32x32xbf16>
    %150 = vector.shape_cast %149 : vector<1x32x32xbf16> to vector<32x32xbf16>
    %cst_48 = arith.constant dense<0.000000e+00> : vector<8x32xf32>
    %151 = tpu.matmul %148, %150, %cst_48 {dimension_numbers = #tpu.dot_dimension_numbers<[1], [0], [0], [1], [0, 0, 1, 1], [], []>} : vector<8x32xbf16>, vector<32x32xbf16>, vector<8x32xf32> -> vector<8x32xf32>
    %152 = vector.broadcast %9 : vector<1x32xf32> to vector<8x32xf32>
    %153 = arith.addf %151, %152 : vector<8x32xf32>
    %154 = arith.addf %153, %5 : vector<8x32xf32>
    %cst_49 = arith.constant dense<0.000000e+00> : vector<8xf32>
    %155 = vector.multi_reduction <add>, %154, %cst_49 [1] : vector<8x32xf32> to vector<8xf32>
    %156 = vector.shape_cast %155 : vector<8xf32> to vector<8x1xf32>
    %cst_50 = arith.constant 3.200000e+01 : f32
    %157 = vector.broadcast %cst_50 : f32 to vector<8x1xf32>
    %158 = arith.divf %156, %157 : vector<8x1xf32>
    %159 = vector.broadcast %158 : vector<8x1xf32> to vector<8x32xf32>
    %160 = arith.subf %154, %159 : vector<8x32xf32>
    %161 = arith.mulf %160, %160 : vector<8x32xf32>
    %cst_51 = arith.constant dense<0.000000e+00> : vector<8xf32>
    %162 = vector.multi_reduction <add>, %161, %cst_51 [1] : vector<8x32xf32> to vector<8xf32>
    %163 = vector.shape_cast %162 : vector<8xf32> to vector<8x1xf32>
    %cst_52 = arith.constant 3.200000e+01 : f32
    %164 = vector.broadcast %cst_52 : f32 to vector<8x1xf32>
    %165 = arith.divf %163, %164 : vector<8x1xf32>
    %166 = vector.broadcast %158 : vector<8x1xf32> to vector<8x32xf32>
    %167 = arith.subf %154, %166 : vector<8x32xf32>
    %cst_53 = arith.constant 9.99999996E-13 : f32
    %168 = vector.broadcast %cst_53 : f32 to vector<8x1xf32>
    %169 = arith.addf %165, %168 : vector<8x1xf32>
    %170 = math.rsqrt %169 : vector<8x1xf32>
    %171 = vector.broadcast %170 : vector<8x1xf32> to vector<8x32xf32>
    %172 = arith.mulf %167, %171 : vector<8x32xf32>
    %173 = vector.broadcast %10 : vector<1x32xf32> to vector<8x32xf32>
    %174 = arith.mulf %172, %173 : vector<8x32xf32>
    %175 = vector.broadcast %11 : vector<1x32xf32> to vector<8x32xf32>
    %176 = arith.addf %174, %175 : vector<8x32xf32>
    %177 = arith.truncf %176 : vector<8x32xf32> to vector<8x32xbf16>
    %c0_54 = arith.constant 0 : index
    %c0_55 = arith.constant 0 : index
    %c0_56 = arith.constant 0 : index
    %178 = vector.load %arg7[%c0_54, %c0_55, %c0_56] : memref<1x32x64xbf16, #tpu.memory_space<vmem>>, vector<1x32x64xbf16>
    %179 = vector.shape_cast %178 : vector<1x32x64xbf16> to vector<32x64xbf16>
    %cst_57 = arith.constant dense<0.000000e+00> : vector<8x64xf32>
    %180 = tpu.matmul %177, %179, %cst_57 {dimension_numbers = #tpu.dot_dimension_numbers<[1], [0], [0], [1], [0, 0, 1, 1], [], []>} : vector<8x32xbf16>, vector<32x64xbf16>, vector<8x64xf32> -> vector<8x64xf32>
    %181 = vector.broadcast %12 : vector<1x64xf32> to vector<8x64xf32>
    %182 = arith.addf %180, %181 : vector<8x64xf32>
    %cst_58 = arith.constant 5.000000e-01 : f32
    %183 = vector.broadcast %cst_58 : f32 to vector<8x64xf32>
    %184 = arith.mulf %183, %182 : vector<8x64xf32>
    %cst_59 = arith.constant 0.636619746 : f32
    %185 = math.sqrt %cst_59 : f32
    %cst_60 = arith.constant 4.471500e-02 : f32
    %186 = vector.broadcast %cst_60 : f32 to vector<8x64xf32>
    %187 = arith.mulf %186, %182 : vector<8x64xf32>
    %188 = arith.mulf %187, %182 : vector<8x64xf32>
    %189 = arith.mulf %188, %182 : vector<8x64xf32>
    %190 = arith.addf %182, %189 : vector<8x64xf32>
    %191 = vector.broadcast %185 : f32 to vector<8x64xf32>
    %192 = arith.mulf %191, %190 : vector<8x64xf32>
    %193 = math.tanh %192 : vector<8x64xf32>
    %cst_61 = arith.constant 1.000000e+00 : f32
    %194 = vector.broadcast %cst_61 : f32 to vector<8x64xf32>
    %195 = arith.addf %194, %193 : vector<8x64xf32>
    %196 = arith.mulf %184, %195 : vector<8x64xf32>
    %197 = arith.truncf %196 : vector<8x64xf32> to vector<8x64xbf16>
    %c0_62 = arith.constant 0 : index
    %c0_63 = arith.constant 0 : index
    %c0_64 = arith.constant 0 : index
    %198 = vector.load %arg8[%c0_62, %c0_63, %c0_64] : memref<1x64x32xbf16, #tpu.memory_space<vmem>>, vector<1x64x32xbf16>
    %199 = vector.shape_cast %198 : vector<1x64x32xbf16> to vector<64x32xbf16>
    %cst_65 = arith.constant dense<0.000000e+00> : vector<8x32xf32>
    %200 = tpu.matmul %197, %199, %cst_65 {dimension_numbers = #tpu.dot_dimension_numbers<[1], [0], [0], [1], [0, 0, 1, 1], [], []>} : vector<8x64xbf16>, vector<64x32xbf16>, vector<8x32xf32> -> vector<8x32xf32>
    %201 = vector.broadcast %13 : vector<1x32xf32> to vector<8x32xf32>
    %202 = arith.addf %200, %201 : vector<8x32xf32>
    %203 = arith.addf %202, %176 : vector<8x32xf32>
    %cst_66 = arith.constant dense<0.000000e+00> : vector<8xf32>
    %204 = vector.multi_reduction <add>, %203, %cst_66 [1] : vector<8x32xf32> to vector<8xf32>
    %205 = vector.shape_cast %204 : vector<8xf32> to vector<8x1xf32>
    %cst_67 = arith.constant 3.200000e+01 : f32
    %206 = vector.broadcast %cst_67 : f32 to vector<8x1xf32>
    %207 = arith.divf %205, %206 : vector<8x1xf32>
    %208 = vector.broadcast %207 : vector<8x1xf32> to vector<8x32xf32>
    %209 = arith.subf %203, %208 : vector<8x32xf32>
    %210 = arith.mulf %209, %209 : vector<8x32xf32>
    %cst_68 = arith.constant dense<0.000000e+00> : vector<8xf32>
    %211 = vector.multi_reduction <add>, %210, %cst_68 [1] : vector<8x32xf32> to vector<8xf32>
    %212 = vector.shape_cast %211 : vector<8xf32> to vector<8x1xf32>
    %cst_69 = arith.constant 3.200000e+01 : f32
    %213 = vector.broadcast %cst_69 : f32 to vector<8x1xf32>
    %214 = arith.divf %212, %213 : vector<8x1xf32>
    %215 = vector.broadcast %207 : vector<8x1xf32> to vector<8x32xf32>
    %216 = arith.subf %203, %215 : vector<8x32xf32>
    %cst_70 = arith.constant 9.99999996E-13 : f32
    %217 = vector.broadcast %cst_70 : f32 to vector<8x1xf32>
    %218 = arith.addf %214, %217 : vector<8x1xf32>
    %219 = math.rsqrt %218 : vector<8x1xf32>
    %220 = vector.broadcast %219 : vector<8x1xf32> to vector<8x32xf32>
    %221 = arith.mulf %216, %220 : vector<8x32xf32>
    %222 = vector.broadcast %14 : vector<1x32xf32> to vector<8x32xf32>
    %223 = arith.mulf %221, %222 : vector<8x32xf32>
    %224 = vector.broadcast %15 : vector<1x32xf32> to vector<8x32xf32>
    %225 = arith.addf %223, %224 : vector<8x32xf32>
    %226 = arith.truncf %225 : vector<8x32xf32> to vector<8x32xbf16>
    %c0_71 = arith.constant 0 : index
    %c0_72 = arith.constant 0 : index
    %227 = vector.load %arg10[%c0_71, %c0_72] : memref<32x16xbf16, #tpu.memory_space<vmem>>, vector<32x16xbf16>
    %cst_73 = arith.constant dense<0.000000e+00> : vector<8x16xf32>
    %228 = tpu.matmul %226, %227, %cst_73 {dimension_numbers = #tpu.dot_dimension_numbers<[1], [0], [0], [1], [0, 0, 1, 1], [], []>} : vector<8x32xbf16>, vector<32x16xbf16>, vector<8x16xf32> -> vector<8x16xf32>
    %c0_74 = arith.constant 0 : index
    %c0_75 = arith.constant 0 : index
    %229 = vector.load %arg11[%c0_74, %c0_75] : memref<1x16xf32, #tpu.memory_space<vmem>>, vector<1x16xf32>
    %230 = vector.broadcast %229 : vector<1x16xf32> to vector<8x16xf32>
    %231 = arith.addf %228, %230 : vector<8x16xf32>
    %232 = vector.shape_cast %226 : vector<8x32xbf16> to vector<1x8x32xbf16>
    %c0_76 = arith.constant 0 : index
    %c0_77 = arith.constant 0 : index
    %c0_78 = arith.constant 0 : index
    %233 = vector.load %arg13[%c0_76, %c0_77, %c0_78] : memref<1x8x32xbf16, #tpu.memory_space<vmem>>, vector<1x8x32xbf16>
    tpu.vector_store %arg13[%c0_76, %c0_77, %c0_78], %232 {strides = array<i32>} : memref<1x8x32xbf16, #tpu.memory_space<vmem>>, vector<1x8x32xbf16>,
    %234 = vector.shape_cast %231 : vector<8x16xf32> to vector<1x8x16xf32>
    %235 = arith.truncf %234 : vector<1x8x16xf32> to vector<1x8x16xbf16>
    %c0_79 = arith.constant 0 : index
    %c0_80 = arith.constant 0 : index
    %c0_81 = arith.constant 0 : index
    %c0_82 = arith.constant 0 : index
    %236 = vector.load %arg12[%c0_79, %c0_80, %c0_81, %c0_82] : memref<1x1x8x16xbf16, #tpu.memory_space<vmem>>, vector<1x1x8x16xbf16>
    %237 = vector.shape_cast %236 : vector<1x1x8x16xbf16> to vector<1x8x16xbf16>
    %238 = vector.shape_cast %235 : vector<1x8x16xbf16> to vector<1x1x8x16xbf16>
    tpu.vector_store %arg12[%c0_79, %c0_80, %c0_81, %c0_82], %238 {strides = array<i32>} : memref<1x1x8x16xbf16, #tpu.memory_space<vmem>>, vector<1x1x8x16xbf16>,
    return
  }
  func.func @transform_0(%arg0: i32, %arg1: i32) -> (i32, i32, i32) {
    %c0_i32 = arith.constant 0 : i32
    %c0_i32_0 = arith.constant 0 : i32
    %c0_i32_1 = arith.constant 0 : i32
    return %arg0, %c0_i32, %c0_i32_0 : i32, i32, i32
  }
  func.func @transform_1(%arg0: i32, %arg1: i32) -> (i32, i32, i32) {
    %c0_i32 = arith.constant 0 : i32
    %c0_i32_0 = arith.constant 0 : i32
    %c0_i32_1 = arith.constant 0 : i32
    return %arg0, %c0_i32, %c0_i32_0 : i32, i32, i32
  }
  func.func @transform_2(%arg0: i32, %arg1: i32) -> (i32, i32, i32, i32) {
    %c0_i32 = arith.constant 0 : i32
    %c0_i32_0 = arith.constant 0 : i32
    %c0_i32_1 = arith.constant 0 : i32
    %c0_i32_2 = arith.constant 0 : i32
    return %arg1, %c0_i32, %c0_i32_0, %c0_i32_1 : i32, i32, i32, i32
  }
  func.func @transform_3(%arg0: i32, %arg1: i32) -> (i32, i32, i32) {
    %c0_i32 = arith.constant 0 : i32
    %c0_i32_0 = arith.constant 0 : i32
    %c0_i32_1 = arith.constant 0 : i32
    return %arg1, %c0_i32, %c0_i32_0 : i32, i32, i32
  }
  func.func @transform_4(%arg0: i32, %arg1: i32) -> (i32, i32, i32) {
    %c0_i32 = arith.constant 0 : i32
    %c0_i32_0 = arith.constant 0 : i32
    %c0_i32_1 = arith.constant 0 : i32
    return %arg1, %c0_i32, %c0_i32_0 : i32, i32, i32
  }
  func.func @transform_5(%arg0: i32, %arg1: i32) -> (i32, i32, i32) {
    %c0_i32 = arith.constant 0 : i32
    %c0_i32_0 = arith.constant 0 : i32
    %c0_i32_1 = arith.constant 0 : i32
    return %arg1, %c0_i32, %c0_i32_0 : i32, i32, i32
  }
  func.func @transform_6(%arg0: i32, %arg1: i32) -> (i32, i32, i32) {
    %c0_i32 = arith.constant 0 : i32
    %c0_i32_0 = arith.constant 0 : i32
    %c0_i32_1 = arith.constant 0 : i32
    return %arg1, %c0_i32, %c0_i32_0 : i32, i32, i32
  }
  func.func @transform_7(%arg0: i32, %arg1: i32) -> (i32, i32, i32) {
    %c0_i32 = arith.constant 0 : i32
    %c0_i32_0 = arith.constant 0 : i32
    %c0_i32_1 = arith.constant 0 : i32
    return %arg1, %c0_i32, %c0_i32_0 : i32, i32, i32
  }
  func.func @transform_8(%arg0: i32, %arg1: i32) -> (i32, i32) {
    %c0_i32 = arith.constant 0 : i32
    %c0_i32_0 = arith.constant 0 : i32
    %c0_i32_1 = arith.constant 0 : i32
    return %c0_i32, %c0_i32_0 : i32, i32
  }
  func.func @transform_9(%arg0: i32, %arg1: i32) -> (i32, i32) {
    %c0_i32 = arith.constant 0 : i32
    %c0_i32_0 = arith.constant 0 : i32
    %c0_i32_1 = arith.constant 0 : i32
    return %c0_i32, %c0_i32_0 : i32, i32
  }
  func.func @transform_10(%arg0: i32, %arg1: i32) -> (i32, i32, i32, i32) {
    %c0_i32 = arith.constant 0 : i32
    %c0_i32_0 = arith.constant 0 : i32
    %c0_i32_1 = arith.constant 0 : i32
    return %arg1, %arg0, %c0_i32, %c0_i32_0 : i32, i32, i32, i32
  }
}

</mosaic_0001>

<llo_original>
// kernel: tpu_custom_call.1
$region0: #{tpu_custom_call.1}
  #allocation0 [shape = 'u32[]', space=smem, size = 0x4, offset = 0x4, fixed_abs, tag = 'smem constant byte address 0x4 - core index']
  #allocation1 [shape = 'u32[144,128]{1,0:T(1,128)}', space=vmem, size = 0x12000, scoped, tag = 'internal scratch']
  #allocation2 [shape = 'bf16[1,8,32]{2,1,0:T(8,128)(2,1)}', space=vmem, size = 0x800, scoped, tag = 'scratch operand']
  %s0 = inlined_call_operand.vmem [shape: bf16[2,8,32], index: 0, kind: input, shape index: {}]
  %s1 = inlined_call_operand.vmem [shape: f32[2,1,8], index: 1, kind: input, shape index: {}]
  %s2 = inlined_call_operand.vmem [shape: bf16[2,4,32,24], index: 2, kind: input, shape index: {}]
  %s3 = inlined_call_operand.vmem [shape: bf16[2,32,32], index: 3, kind: input, shape index: {}]
  %s4 = inlined_call_operand.vmem [shape: bf16[2,32,32], index: 4, kind: input, shape index: {}]
  %s5 = inlined_call_operand.vmem [shape: bf16[2,32,64], index: 5, kind: input, shape index: {}]
  %s6 = inlined_call_operand.vmem [shape: bf16[2,64,32], index: 6, kind: input, shape index: {}]
  %s7 = inlined_call_operand.vmem [shape: f32[2,16,96], index: 7, kind: input, shape index: {}]
  %s8 = inlined_call_operand.vmem [shape: bf16[32,16], index: 8, kind: input, shape index: {}]
  %s9 = inlined_call_operand.vmem [shape: f32[1,16], index: 9, kind: input, shape index: {}]
  %s10 = inlined_call_operand.hbm [shape: bf16[2,2,8,16], index: 10, kind: output, shape index: {}]
  %s11 = sld [smem:[#allocation0]]
  $region77: #{tpu_custom_call.1} parent=0
    _
  %s13 = ssub.s32 1, %s11
  %s14 = scalar_select 0, %s13, %s11
  $region1: #{tpu_custom_call.1} parent=0
    #allocation3 [shape = 'u8[4096]{0}', space=vmem, size = 0x1000, scoped, tag = 'output window, operand 0']
    #allocation4 [shape = 's32[2]{0}', space=sflag, size = 0x8, scoped, tag = 'scoped memory for tpu_custom_call.1']
    %15 = vsyncpa [#allocation4], 0
    %s16 = scalar_lea.sflag [#allocation4], 1
    %17 = vsyncpa %s16, 0
    loop: start=0, step=1, limit=6
    $region2: #{tpu_custom_call.1} parent=1 // loop_pre_header
      _
    $region3: #{tpu_custom_call.1} parent=1 // loop_header
      %s19 = sphi 0, %s23
      %p20 = scmp.ge.s32.totalorder %s19, 6
      %s26 = sphi 0, %s38
      %s27 = sphi 0, %s34
      %s28 = sphi 0, %s26
      %s29 = sphi 0, %s27
      %s30 = sphi 0, %s28
      %s31 = sphi 0, %s29
      %s41 = sphi 0, %s43
      %s44 = sphi 0, %s41
      %s45 = sphi 0, %s44
      %s61 = sphi 0, %s45
      %s67 = sphi 0, %s69
      %s70 = sphi 0, %s67
      %s71 = sphi 0, %s70
      %s87 = sphi 0, %s71
      %s93 = sphi 0, %s95
      %s96 = sphi 0, %s93
      %s97 = sphi 0, %s96
      %s113 = sphi 0, %s97
      %s119 = sphi 0, %s121
      %s122 = sphi 0, %s119
      %s123 = sphi 0, %s122
      %s139 = sphi 0, %s123
      %s145 = sphi 0, %s147
      %s148 = sphi 0, %s145
      %s149 = sphi 0, %s148
      %s165 = sphi 0, %s149
      %s171 = sphi 0, %s173
      %s174 = sphi 0, %s171
      %s175 = sphi 0, %s174
      %s191 = sphi 0, %s175
      %s197 = sphi 0, %s199
      %s200 = sphi 0, %s197
      %s201 = sphi 0, %s200
      %s217 = sphi 0, %s201
      %s223 = sphi 0, %s225
      %s226 = sphi 0, %s223
      %s227 = sphi 0, %s226
      %s243 = sphi 0, %s227
      %s247 = sphi 0, %s247
      %s249 = sphi 0, %s247
      %s250 = sphi 0, %s249
      %s264 = sphi 0, %s250
      %s268 = sphi 0, %s268
      %s270 = sphi 0, %s268
      %s271 = sphi 0, %s270
      %s285 = sphi 0, %s271
      %s293 = sphi 0, %s295
      %s296 = sphi 0, %s293
      %s297 = sphi 0, %s296
      %s313 = sphi 0, %s297
    $region4: #{tpu_custom_call.1} parent=1 // loop_header_branch
      %22 = sbr.rel (%p20) target = $region8
    $region5: #{tpu_custom_call.1} parent=1 // loop_body
      %s24 = ssub.s32 %s19, 1
      %s25 = ssub.s32 %s19, 2
      %s32 = sadd.s32 1, %s27
      %p33 = scmp.ge.s32.totalorder %s32, 2
      %s34 = scalar_select %p33, 0, %s32
      %s35 = sadd.s32 1, %s26
      %s36 = scalar_select %p33, %s35, %s26
      %p37 = scmp.ge.s32.totalorder %s36, 2
      %s38 = scalar_select %p37, 0, %s36
      %s39 = ssub.s32 %s26, %s38
      %p40 = scmp.eq.s32.totalorder %s39, 0
      %s42 = sadd.s32 %s41, 1
      %s43 = scalar_select %p40, %s41, %s42
      %p46 = pneg %p40
      %p47 = scmp.eq.s32.totalorder %s19, 3
      %p48 = por %p46, %p47
      %p49 = scmp.ne.s32.totalorder %s41, %s44
      %p50 = scmp.eq.s32.totalorder %s19, 0
      %p51 = por %p49, %p50
      %p52 = scmp.ne.s32.totalorder %s41, %s44
      %p53 = scmp.eq.s32.totalorder %s24, 3
      %p54 = por %p52, %p53
      %p55 = scmp.ne.s32.totalorder %s44, %s45
      %p56 = scmp.eq.s32.totalorder %s24, 0
      %p57 = por %p55, %p56
      %p58 = scmp.ne.s32.totalorder %s44, %s45
      %p59 = scmp.eq.s32.totalorder %s25, 3
      %p60 = por %p58, %p59
      %p62 = scmp.ne.s32.totalorder %s45, %s61
      %p63 = scmp.eq.s32.totalorder %s25, 0
      %p64 = por %p62, %p63
      %s65 = ssub.s32 %s26, %s38
      %p66 = scmp.eq.s32.totalorder %s65, 0
      %s68 = sadd.s32 %s67, 1
      %s69 = scalar_select %p66, %s67, %s68
      %p72 = pneg %p66
      %p73 = scmp.eq.s32.totalorder %s19, 3
      %p74 = por %p72, %p73
      %p75 = scmp.ne.s32.totalorder %s67, %s70
      %p76 = scmp.eq.s32.totalorder %s19, 0
      %p77 = por %p75, %p76
      %p78 = scmp.ne.s32.totalorder %s67, %s70
      %p79 = scmp.eq.s32.totalorder %s24, 3
      %p80 = por %p78, %p79
      %p81 = scmp.ne.s32.totalorder %s70, %s71
      %p82 = scmp.eq.s32.totalorder %s24, 0
      %p83 = por %p81, %p82
      %p84 = scmp.ne.s32.totalorder %s70, %s71
      %p85 = scmp.eq.s32.totalorder %s25, 3
      %p86 = por %p84, %p85
      %p88 = scmp.ne.s32.totalorder %s71, %s87
      %p89 = scmp.eq.s32.totalorder %s25, 0
      %p90 = por %p88, %p89
      %s91 = ssub.s32 %s27, %s34
      %p92 = scmp.eq.s32.totalorder %s91, 0
      %s94 = sadd.s32 %s93, 1
      %s95 = scalar_select %p92, %s93, %s94
      %p98 = pneg %p92
      %p99 = scmp.eq.s32.totalorder %s19, 3
      %p100 = por %p98, %p99
      %p101 = scmp.ne.s32.totalorder %s93, %s96
      %p102 = scmp.eq.s32.totalorder %s19, 0
      %p103 = por %p101, %p102
      %p104 = scmp.ne.s32.totalorder %s93, %s96
      %p105 = scmp.eq.s32.totalorder %s24, 3
      %p106 = por %p104, %p105
      %p107 = scmp.ne.s32.totalorder %s96, %s97
      %p108 = scmp.eq.s32.totalorder %s24, 0
      %p109 = por %p107, %p108
      %p110 = scmp.ne.s32.totalorder %s96, %s97
      %p111 = scmp.eq.s32.totalorder %s25, 3
      %p112 = por %p110, %p111
      %p114 = scmp.ne.s32.totalorder %s97, %s113
      %p115 = scmp.eq.s32.totalorder %s25, 0
      %p116 = por %p114, %p115
      %s117 = ssub.s32 %s27, %s34
      %p118 = scmp.eq.s32.totalorder %s117, 0
      %s120 = sadd.s32 %s119, 1
      %s121 = scalar_select %p118, %s119, %s120
      %p124 = pneg %p118
      %p125 = scmp.eq.s32.totalorder %s19, 3
      %p126 = por %p124, %p125
      %p127 = scmp.ne.s32.totalorder %s119, %s122
      %p128 = scmp.eq.s32.totalorder %s19, 0
      %p129 = por %p127, %p128
      %p130 = scmp.ne.s32.totalorder %s119, %s122
      %p131 = scmp.eq.s32.totalorder %s24, 3
      %p132 = por %p130, %p131
      %p133 = scmp.ne.s32.totalorder %s122, %s123
      %p134 = scmp.eq.s32.totalorder %s24, 0
      %p135 = por %p133, %p134
      %p136 = scmp.ne.s32.totalorder %s122, %s123
      %p137 = scmp.eq.s32.totalorder %s25, 3
      %p138 = por %p136, %p137
      %p140 = scmp.ne.s32.totalorder %s123, %s139
      %p141 = scmp.eq.s32.totalorder %s25, 0
      %p142 = por %p140, %p141
      %s143 = ssub.s32 %s27, %s34
      %p144 = scmp.eq.s32.totalorder %s143, 0
      %s146 = sadd.s32 %s145, 1
      %s147 = scalar_select %p144, %s145, %s146
      %p150 = pneg %p144
      %p151 = scmp.eq.s32.totalorder %s19, 3
      %p152 = por %p150, %p151
      %p153 = scmp.ne.s32.totalorder %s145, %s148
      %p154 = scmp.eq.s32.totalorder %s19, 0
      %p155 = por %p153, %p154
      %p156 = scmp.ne.s32.totalorder %s145, %s148
      %p157 = scmp.eq.s32.totalorder %s24, 3
      %p158 = por %p156, %p157
      %p159 = scmp.ne.s32.totalorder %s148, %s149
      %p160 = scmp.eq.s32.totalorder %s24, 0
      %p161 = por %p159, %p160
      %p162 = scmp.ne.s32.totalorder %s148, %s149
      %p163 = scmp.eq.s32.totalorder %s25, 3
      %p164 = por %p162, %p163
      %p166 = scmp.ne.s32.totalorder %s149, %s165
      %p167 = scmp.eq.s32.totalorder %s25, 0
      %p168 = por %p166, %p167
      %s169 = ssub.s32 %s27, %s34
      %p170 = scmp.eq.s32.totalorder %s169, 0
      %s172 = sadd.s32 %s171, 1
      %s173 = scalar_select %p170, %s171, %s172
      %p176 = pneg %p170
      %p177 = scmp.eq.s32.totalorder %s19, 3
      %p178 = por %p176, %p177
      %p179 = scmp.ne.s32.totalorder %s171, %s174
      %p180 = scmp.eq.s32.totalorder %s19, 0
      %p181 = por %p179, %p180
      %p182 = scmp.ne.s32.totalorder %s171, %s174
      %p183 = scmp.eq.s32.totalorder %s24, 3
      %p184 = por %p182, %p183
      %p185 = scmp.ne.s32.totalorder %s174, %s175
      %p186 = scmp.eq.s32.totalorder %s24, 0
      %p187 = por %p185, %p186
      %p188 = scmp.ne.s32.totalorder %s174, %s175
      %p189 = scmp.eq.s32.totalorder %s25, 3
      %p190 = por %p188, %p189
      %p192 = scmp.ne.s32.totalorder %s175, %s191
      %p193 = scmp.eq.s32.totalorder %s25, 0
      %p194 = por %p192, %p193
      %s195 = ssub.s32 %s27, %s34
      %p196 = scmp.eq.s32.totalorder %s195, 0
      %s198 = sadd.s32 %s197, 1
      %s199 = scalar_select %p196, %s197, %s198
      %p202 = pneg %p196
      %p203 = scmp.eq.s32.totalorder %s19, 3
      %p204 = por %p202, %p203
      %p205 = scmp.ne.s32.totalorder %s197, %s200
      %p206 = scmp.eq.s32.totalorder %s19, 0
      %p207 = por %p205, %p206
      %p208 = scmp.ne.s32.totalorder %s197, %s200
      %p209 = scmp.eq.s32.totalorder %s24, 3
      %p210 = por %p208, %p209
      %p211 = scmp.ne.s32.totalorder %s200, %s201
      %p212 = scmp.eq.s32.totalorder %s24, 0
      %p213 = por %p211, %p212
      %p214 = scmp.ne.s32.totalorder %s200, %s201
      %p215 = scmp.eq.s32.totalorder %s25, 3
      %p216 = por %p214, %p215
      %p218 = scmp.ne.s32.totalorder %s201, %s217
      %p219 = scmp.eq.s32.totalorder %s25, 0
      %p220 = por %p218, %p219
      %s221 = ssub.s32 %s27, %s34
      %p222 = scmp.eq.s32.totalorder %s221, 0
      %s224 = sadd.s32 %s223, 1
      %s225 = scalar_select %p222, %s223, %s224
      %p228 = pneg %p222
      %p229 = scmp.eq.s32.totalorder %s19, 3
      %p230 = por %p228, %p229
      %p231 = scmp.ne.s32.totalorder %s223, %s226
      %p232 = scmp.eq.s32.totalorder %s19, 0
      %p233 = por %p231, %p232
      %p234 = scmp.ne.s32.totalorder %s223, %s226
      %p235 = scmp.eq.s32.totalorder %s24, 3
      %p236 = por %p234, %p235
      %p237 = scmp.ne.s32.totalorder %s226, %s227
      %p238 = scmp.eq.s32.totalorder %s24, 0
      %p239 = por %p237, %p238
      %p240 = scmp.ne.s32.totalorder %s226, %s227
      %p241 = scmp.eq.s32.totalorder %s25, 3
      %p242 = por %p240, %p241
      %p244 = scmp.ne.s32.totalorder %s227, %s243
      %p245 = scmp.eq.s32.totalorder %s25, 0
      %p246 = por %p244, %p245
      %s248 = sadd.s32 %s247, 1
      %p251 = scmp.eq.s32.totalorder %s19, 3
      %p252 = scmp.ne.s32.totalorder %s247, %s249
      %p253 = scmp.eq.s32.totalorder %s19, 0
      %p254 = por %p252, %p253
      %p255 = scmp.ne.s32.totalorder %s247, %s249
      %p256 = scmp.eq.s32.totalorder %s24, 3
      %p257 = por %p255, %p256
      %p258 = scmp.ne.s32.totalorder %s249, %s250
      %p259 = scmp.eq.s32.totalorder %s24, 0
      %p260 = por %p258, %p259
      %p261 = scmp.ne.s32.totalorder %s249, %s250
      %p262 = scmp.eq.s32.totalorder %s25, 3
      %p263 = por %p261, %p262
      %p265 = scmp.ne.s32.totalorder %s250, %s264
      %p266 = scmp.eq.s32.totalorder %s25, 0
      %p267 = por %p265, %p266
      %s269 = sadd.s32 %s268, 1
      %p272 = scmp.eq.s32.totalorder %s19, 3
      %p273 = scmp.ne.s32.totalorder %s268, %s270
      %p274 = scmp.eq.s32.totalorder %s19, 0
      %p275 = por %p273, %p274
      %p276 = scmp.ne.s32.totalorder %s268, %s270
      %p277 = scmp.eq.s32.totalorder %s24, 3
      %p278 = por %p276, %p277
      %p279 = scmp.ne.s32.totalorder %s270, %s271
      %p280 = scmp.eq.s32.totalorder %s24, 0
      %p281 = por %p279, %p280
      %p282 = scmp.ne.s32.totalorder %s270, %s271
      %p283 = scmp.eq.s32.totalorder %s25, 3
      %p284 = por %p282, %p283
      %p286 = scmp.ne.s32.totalorder %s271, %s285
      %p287 = scmp.eq.s32.totalorder %s25, 0
      %p288 = por %p286, %p287
      %s289 = ssub.s32 %s27, %s34
      %s290 = ssub.s32 %s26, %s38
      %s291 = sor.u32 %s289, %s290
      %p292 = scmp.eq.s32.totalorder %s291, 0
      %s294 = sadd.s32 %s293, 1
      %s295 = scalar_select %p292, %s293, %s294
      %p298 = pneg %p292
      %p299 = scmp.eq.s32.totalorder %s19, 3
      %p300 = por %p298, %p299
      %p301 = scmp.ne.s32.totalorder %s293, %s296
      %p302 = scmp.eq.s32.totalorder %s19, 0
      %p303 = por %p301, %p302
      %p304 = scmp.ne.s32.totalorder %s293, %s296
      %p305 = scmp.eq.s32.totalorder %s24, 3
      %p306 = por %p304, %p305
      %p307 = scmp.ne.s32.totalorder %s296, %s297
      %p308 = scmp.eq.s32.totalorder %s24, 0
      %p309 = por %p307, %p308
      %p310 = scmp.ne.s32.totalorder %s296, %s297
      %p311 = scmp.eq.s32.totalorder %s25, 3
      %p312 = por %p310, %p311
      %p314 = scmp.ne.s32.totalorder %s297, %s313
      %p315 = scmp.eq.s32.totalorder %s25, 0
      %p316 = por %p314, %p315
      %p317 = scmp.le.s32.totalorder 1, %s19
      %p318 = scmp.lt.s32.totalorder %s19, 5
      %p319 = pnand %p317, %p318
      %p320 = pneg %p319
      // Predicated region
      $region9: #{tpu_custom_call.1} parent=5 // pred_check
        _
      $region10: #{tpu_custom_call.1} parent=5 // pred_check_branch
        %322 = sbr.rel (%p319) target = $region12
      $region11: #{tpu_custom_call.1} parent=5 // pred_region
        %s323 = ssub.s32 %s19, 1
        // Predicated region
        $region13: #{tpu_custom_call.1} parent=11 // pred_check
          %p324 = pneg %p260
        $region14: #{tpu_custom_call.1} parent=11 // pred_check_branch
          %326 = sbr.rel (%p324) target = $region16
        $region15: #{tpu_custom_call.1} parent=11 // pred_region
          _
        $region16: #{tpu_custom_call.1} parent=11 // pred_fallthru
          _
        // Predicated region
        $region17: #{tpu_custom_call.1} parent=11 // pred_check
          %p327 = pneg %p281
        $region18: #{tpu_custom_call.1} parent=11 // pred_check_branch
          %329 = sbr.rel (%p327) target = $region20
        $region19: #{tpu_custom_call.1} parent=11 // pred_region
          _
        $region20: #{tpu_custom_call.1} parent=11 // pred_fallthru
          _
      $region12: #{tpu_custom_call.1} parent=5 // pred_fallthru
        _
      %p330 = scmp.lt.s32.totalorder %s19, 4
      // Predicated region
      $region21: #{tpu_custom_call.1} parent=5 // pred_check
        %p331 = pneg %p330
      $region22: #{tpu_custom_call.1} parent=5 // pred_check_branch
        %333 = sbr.rel (%p331) target = $region24
      $region23: #{tpu_custom_call.1} parent=5 // pred_region
        // Predicated region
        $region25: #{tpu_custom_call.1} parent=23 // pred_check
          %p334 = pneg %p51
        $region26: #{tpu_custom_call.1} parent=23 // pred_check_branch
          %336 = sbr.rel (%p334) target = $region28
        $region27: #{tpu_custom_call.1} parent=23 // pred_region
          %p337 = scmp.lt.s32.totalorder %s26, 1
          %s338 = scalar_select %p337, %s26, 1
          %s339 = smul.addr %s338, 4
          %s340 = scalar_lea.vmem %s0, %s339
        $region28: #{tpu_custom_call.1} parent=23 // pred_fallthru
          _
        // Predicated region
        $region29: #{tpu_custom_call.1} parent=23 // pred_check
          %p341 = pneg %p77
        $region30: #{tpu_custom_call.1} parent=23 // pred_check_branch
          %343 = sbr.rel (%p341) target = $region32
        $region31: #{tpu_custom_call.1} parent=23 // pred_region
          %p344 = scmp.lt.s32.totalorder %s26, 1
          %s345 = scalar_select %p344, %s26, 1
          %s346 = scalar_lea.vmem %s1, %s345
        $region32: #{tpu_custom_call.1} parent=23 // pred_fallthru
          _
        // Predicated region
        $region33: #{tpu_custom_call.1} parent=23 // pred_check
          %p347 = pneg %p103
        $region34: #{tpu_custom_call.1} parent=23 // pred_check_branch
          %349 = sbr.rel (%p347) target = $region36
        $region35: #{tpu_custom_call.1} parent=23 // pred_region
          %p350 = scmp.lt.s32.totalorder %s27, 1
          %s351 = scalar_select %p350, %s27, 1
          %s352 = smul.addr %s351, 16
          %s353 = smul.addr %s352, 4
          %s354 = scalar_lea.vmem %s2, %s353
        $region36: #{tpu_custom_call.1} parent=23 // pred_fallthru
          _
        // Predicated region
        $region37: #{tpu_custom_call.1} parent=23 // pred_check
          %p355 = pneg %p129
        $region38: #{tpu_custom_call.1} parent=23 // pred_check_branch
          %357 = sbr.rel (%p355) target = $region40
        $region39: #{tpu_custom_call.1} parent=23 // pred_region
          %p358 = scmp.lt.s32.totalorder %s27, 1
          %s359 = scalar_select %p358, %s27, 1
          %s360 = smul.addr %s359, 4
          %s361 = smul.addr %s360, 4
          %s362 = scalar_lea.vmem %s3, %s361
        $region40: #{tpu_custom_call.1} parent=23 // pred_fallthru
          _
        // Predicated region
        $region41: #{tpu_custom_call.1} parent=23 // pred_check
          %p363 = pneg %p155
        $region42: #{tpu_custom_call.1} parent=23 // pred_check_branch
          %365 = sbr.rel (%p363) target = $region44
        $region43: #{tpu_custom_call.1} parent=23 // pred_region
          %p366 = scmp.lt.s32.totalorder %s27, 1
          %s367 = scalar_select %p366, %s27, 1
          %s368 = smul.addr %s367, 4
          %s369 = smul.addr %s368, 4
          %s370 = scalar_lea.vmem %s4, %s369
        $region44: #{tpu_custom_call.1} parent=23 // pred_fallthru
          _
        // Predicated region
        $region45: #{tpu_custom_call.1} parent=23 // pred_check
          %p371 = pneg %p181
        $region46: #{tpu_custom_call.1} parent=23 // pred_check_branch
          %373 = sbr.rel (%p371) target = $region48
        $region47: #{tpu_custom_call.1} parent=23 // pred_region
          %p374 = scmp.lt.s32.totalorder %s27, 1
          %s375 = scalar_select %p374, %s27, 1
          %s376 = smul.addr %s375, 4
          %s377 = smul.addr %s376, 4
          %s378 = scalar_lea.vmem %s5, %s377
        $region48: #{tpu_custom_call.1} parent=23 // pred_fallthru
          _
        // Predicated region
        $region49: #{tpu_custom_call.1} parent=23 // pred_check
          %p379 = pneg %p207
        $region50: #{tpu_custom_call.1} parent=23 // pred_check_branch
          %381 = sbr.rel (%p379) target = $region52
        $region51: #{tpu_custom_call.1} parent=23 // pred_region
          %p382 = scmp.lt.s32.totalorder %s27, 1
          %s383 = scalar_select %p382, %s27, 1
          %s384 = smul.addr %s383, 8
          %s385 = smul.addr %s384, 4
          %s386 = scalar_lea.vmem %s6, %s385
        $region52: #{tpu_custom_call.1} parent=23 // pred_fallthru
          _
        // Predicated region
        $region53: #{tpu_custom_call.1} parent=23 // pred_check
          %p387 = pneg %p233
        $region54: #{tpu_custom_call.1} parent=23 // pred_check_branch
          %389 = sbr.rel (%p387) target = $region56
        $region55: #{tpu_custom_call.1} parent=23 // pred_region
          %p390 = scmp.lt.s32.totalorder %s27, 1
          %s391 = scalar_select %p390, %s27, 1
          %s392 = smul.addr %s391, 2
          %s393 = smul.addr %s392, 8
          %s394 = scalar_lea.vmem %s7, %s393
        $region56: #{tpu_custom_call.1} parent=23 // pred_fallthru
          _
      $region24: #{tpu_custom_call.1} parent=5 // pred_fallthru
        _
      %p395 = scmp.le.s32.totalorder 1, %s19
      %p396 = scmp.lt.s32.totalorder %s19, 5
      %p397 = pnand %p395, %p396
      %p398 = pneg %p397
      // Predicated region
      $region57: #{tpu_custom_call.1} parent=5 // pred_check
        _
      $region58: #{tpu_custom_call.1} parent=5 // pred_check_branch
        %400 = sbr.rel (%p397) target = $region60
      $region59: #{tpu_custom_call.1} parent=5 // pred_region
        %s401 = ssub.s32 %s19, 1
        %p402 = scmp.lt.s32.totalorder %s28, 1
        %s403 = scalar_select %p402, %s28, 1
        %s404 = smul.addr %s403, 4
        %s405 = scalar_lea.vmem %s0, %s404
        %p406 = pneg %p57
        %p407 = pneg %p54
        %p408 = scmp.lt.s32.totalorder %s28, 1
        %s409 = scalar_select %p408, %s28, 1
        %s410 = scalar_lea.vmem %s1, %s409
        %p411 = pneg %p83
        %p412 = pneg %p80
        %p413 = scmp.lt.s32.totalorder %s29, 1
        %s414 = scalar_select %p413, %s29, 1
        %s415 = smul.addr %s414, 16
        %s416 = smul.addr %s415, 4
        %s417 = scalar_lea.vmem %s2, %s416
        %p418 = pneg %p109
        %p419 = pneg %p106
        %p420 = scmp.lt.s32.totalorder %s29, 1
        %s421 = scalar_select %p420, %s29, 1
        %s422 = smul.addr %s421, 4
        %s423 = smul.addr %s422, 4
        %s424 = scalar_lea.vmem %s3, %s423
        %p425 = pneg %p135
        %p426 = pneg %p132
        %p427 = scmp.lt.s32.totalorder %s29, 1
        %s428 = scalar_select %p427, %s29, 1
        %s429 = smul.addr %s428, 4
        %s430 = smul.addr %s429, 4
        %s431 = scalar_lea.vmem %s4, %s430
        %p432 = pneg %p161
        %p433 = pneg %p158
        %p434 = scmp.lt.s32.totalorder %s29, 1
        %s435 = scalar_select %p434, %s29, 1
        %s436 = smul.addr %s435, 4
        %s437 = smul.addr %s436, 4
        %s438 = scalar_lea.vmem %s5, %s437
        %p439 = pneg %p187
        %p440 = pneg %p184
        %p441 = scmp.lt.s32.totalorder %s29, 1
        %s442 = scalar_select %p441, %s29, 1
        %s443 = smul.addr %s442, 8
        %s444 = smul.addr %s443, 4
        %s445 = scalar_lea.vmem %s6, %s444
        %p446 = pneg %p213
        %p447 = pneg %p210
        %p448 = scmp.lt.s32.totalorder %s29, 1
        %s449 = scalar_select %p448, %s29, 1
        %s450 = smul.addr %s449, 2
        %s451 = smul.addr %s450, 8
        %s452 = scalar_lea.vmem %s7, %s451
        %p453 = pneg %p239
        %p454 = pneg %p236
        %p455 = pneg %p260
        %p456 = pneg %p257
        %p457 = pneg %p281
        %p458 = pneg %p278
        %p459 = pneg %p309
        %p460 = pneg %p306
        %s461 = sand.u32 %s296, 1
        %s462 = scalar_lea.sflag [#allocation4], %s461
        %s463 = sand.u32 %s296, 1
        %s464 = smul.addr %s463, 4
        %s465 = scalar_lea.vmem [#allocation3], %s464
        %p466 = scmp.lt.s32.totalorder %s28, 1
        %s467 = scalar_select %p466, %s28, 1
        %s468 = smul.addr %s467, 4
        %s469 = scalar_lea.vmem %s0, %s468
        %p470 = scmp.lt.s32.totalorder %s28, 1
        %s471 = scalar_select %p470, %s28, 1
        %s472 = scalar_lea.vmem %s1, %s471
        %p473 = scmp.lt.s32.totalorder %s29, 1
        %s474 = scalar_select %p473, %s29, 1
        %s475 = smul.addr %s474, 16
        %s476 = smul.addr %s475, 4
        %s477 = scalar_lea.vmem %s2, %s476
        %p478 = scmp.lt.s32.totalorder %s29, 1
        %s479 = scalar_select %p478, %s29, 1
        %s480 = smul.addr %s479, 4
        %s481 = smul.addr %s480, 4
        %s482 = scalar_lea.vmem %s3, %s481
        %p483 = scmp.lt.s32.totalorder %s29, 1
        %s484 = scalar_select %p483, %s29, 1
        %s485 = smul.addr %s484, 4
        %s486 = smul.addr %s485, 4
        %s487 = scalar_lea.vmem %s4, %s486
        %p488 = scmp.lt.s32.totalorder %s29, 1
        %s489 = scalar_select %p488, %s29, 1
        %s490 = smul.addr %s489, 4
        %s491 = smul.addr %s490, 4
        %s492 = scalar_lea.vmem %s5, %s491
        %p493 = scmp.lt.s32.totalorder %s29, 1
        %s494 = scalar_select %p493, %s29, 1
        %s495 = smul.addr %s494, 8
        %s496 = smul.addr %s495, 4
        %s497 = scalar_lea.vmem %s6, %s496
        %p498 = scmp.lt.s32.totalorder %s29, 1
        %s499 = scalar_select %p498, %s29, 1
        %s500 = smul.addr %s499, 2
        %s501 = smul.addr %s500, 8
        %s502 = scalar_lea.vmem %s7, %s501
        %p504 = scmp.eq.s32.totalorder %s29, 0
        // Predicated region
        $region61: #{tpu_custom_call.1} parent=59 // pred_check
          %p505 = pneg %p504
        $region62: #{tpu_custom_call.1} parent=59 // pred_check_branch
          %507 = sbr.rel (%p505) target = $region64
        $region63: #{tpu_custom_call.1} parent=59 // pred_region
          %v508 = vld [vmem:[%s469] sm:$0xf]
          %vm509 = vcmask 257024
          %510 = vst.msk [vmem:[#allocation2] sm:$0xf] %vm509, %v508
        $region64: #{tpu_custom_call.1} parent=59 // pred_fallthru
          _
        %v511 = vld [vmem:[#allocation2] sm:$0xf]
        %v512 = vunpack.c.l.bf16 %v511
        %v513 = vld [vmem:[%s502] sm:$0xff]
        %v514 = vld [vmem:[%s502 + $0x8] sm:$0xff]
        %v515 = vld [vmem:[%s472] sm:$0x1]
        %v516 = vld [vmem:[%s477] sm:$0xf]
        %v517 = vld [vmem:[%s477 + $0x4] sm:$0xf]
        %v518 = vld [vmem:[%s477 + $0x8] sm:$0xf]
        %v519 = vld [vmem:[%s477 + $0xc] sm:$0xf]
        %v520 = vlaneseq
        %v521 = vshrl.u32 %v520, 7
        %v522 = vsub.s32 0, %v521
        %v523 = vrot.slane %v513, %v522
        %v528 = vunpack.c.l.b16 %v516
        %v529 = vunpack.c.l.b16 %v517
        %v530 = vunpack.c.l.b16 %v518
        %v531 = vunpack.c.l.b16 %v519
        %v532 = vpack.c.b16 %v529, %v528
        %v533 = vpack.c.b16 %v531, %v530
        %vm536 = vcmask 261120
        %v538 = vsel %vm536, %v511, 0
        %540 = vmatprep.subr.bf16.mxu0 0
        %541 = vmatpush1.bf16.msra.mxu0 %v532
        %542 = vmatprep.subr.bf16.mxu0 0
        %543 = vmatpush1.bf16.msra.mxu0 %v533
        %544 = vmatprep.subr.bf16.mxu0 0
        %545 = vmatpush1.bf16.msra.mxu0 0
        %546 = vmatprep.subr.bf16.mxu0 0
        %547 = vmatpush1.bf16.msra.mxu0 0
        %548 = vmatprep.subr.bf16.mxu0 0
        %549 = vmatpush1.bf16.msra.mxu0 0
        %550 = vmatprep.subr.bf16.mxu0 0
        %551 = vmatpush1.bf16.msra.mxu0 0
        %552 = vmatprep.subr.bf16.mxu0 0
        %553 = vmatpush1.bf16.msra.mxu0 0
        %554 = vmatprep.subr.bf16.mxu0 0
        %555 = vmatpush1.bf16.msra.mxu0 0
        %556 = vmatprep.subr.bf16.mxu0 0
        %557 = vmatpush1.bf16.msra.mxu0 0
        %558 = vmatprep.subr.bf16.mxu0 0
        %559 = vmatpush1.bf16.msra.mxu0 0
        %560 = vmatprep.subr.bf16.mxu0 0
        %561 = vmatpush1.bf16.msra.mxu0 0
        %562 = vmatprep.subr.bf16.mxu0 0
        %563 = vmatpush1.bf16.msra.mxu0 0
        %564 = vmatprep.subr.bf16.mxu0 0
        %565 = vmatpush1.bf16.msra.mxu0 0
        %566 = vmatprep.subr.bf16.mxu0 0
        %567 = vmatpush1.bf16.msra.mxu0 0
        %568 = vmatprep.subr.bf16.mxu0 0
        %569 = vmatpush1.bf16.msra.mxu0 0
        %570 = vmatprep.subr.bf16.mxu0 0
        %571 = vmatpush1.bf16.msra.mxu0 0
        %572 = vmatprep.mubr.bf16.mxu0 0
        %573 = vmatmul.mubr.bf16.gmra.mrb[0].mxu0 %v538
        %v574 = vpop.f32.mrb[0].mxu0
        %v575 = vadd.f32 %v523, %v574
        %v576 = vpop.f32.mrb[0].mxu0
        %v577 = vpop.f32.mrb[0].mxu0
        %v578 = vpop.f32.mrb[0].mxu0
        %579 = vdwg.mxu0
        %v580 = vpack.c.bf16 %v575, %v575
        %v582 = vlaneseq
        %v583 = vshrl.u32 %v582, 7
        %v584 = vsub.s32 0, %v583
        %v585 = vrot.slane %v515, %v584
        %588 = vrot.lane.b32.xlu0 %v580, 120
        %v589 = vpop.permute.xlu0 %588
        %vm590 = vcmask 64512
        %v592 = vsel %vm590, %v580, 0
        %v595 = vsel %vm590, %v589, 0
        %597 = vmatprep.subr.bf16.mxu0 0
        %598 = vmatpush1.bf16.xpose.msra.mxu0 %v595
        %599 = vmatprep.subr.bf16.mxu0 0
        %600 = vmatpush1.bf16.xpose.msra.mxu0 0
        %601 = vmatprep.subr.bf16.mxu0 0
        %602 = vmatpush1.bf16.xpose.msra.mxu0 0
        %603 = vmatprep.subr.bf16.mxu0 0
        %604 = vmatpush1.bf16.xpose.msra.mxu0 0
        %605 = vmatprep.subr.bf16.mxu0 0
        %606 = vmatpush1.bf16.xpose.msra.mxu0 0
        %607 = vmatprep.subr.bf16.mxu0 0
        %608 = vmatpush1.bf16.xpose.msra.mxu0 0
        %609 = vmatprep.subr.bf16.mxu0 0
        %610 = vmatpush1.bf16.xpose.msra.mxu0 0
        %611 = vmatprep.subr.bf16.mxu0 0
        %612 = vmatpush1.bf16.xpose.msra.mxu0 0
        %613 = vmatprep.subr.bf16.mxu0 0
        %614 = vmatpush1.bf16.xpose.msra.mxu0 0
        %615 = vmatprep.subr.bf16.mxu0 0
        %616 = vmatpush1.bf16.xpose.msra.mxu0 0
        %617 = vmatprep.subr.bf16.mxu0 0
        %618 = vmatpush1.bf16.xpose.msra.mxu0 0
        %619 = vmatprep.subr.bf16.mxu0 0
        %620 = vmatpush1.bf16.xpose.msra.mxu0 0
        %621 = vmatprep.subr.bf16.mxu0 0
        %622 = vmatpush1.bf16.xpose.msra.mxu0 0
        %623 = vmatprep.subr.bf16.mxu0 0
        %624 = vmatpush1.bf16.xpose.msra.mxu0 0
        %625 = vmatprep.subr.bf16.mxu0 0
        %626 = vmatpush1.bf16.xpose.msra.mxu0 0
        %627 = vmatprep.subr.bf16.mxu0 0
        %628 = vmatpush1.bf16.xpose.msra.mxu0 0
        %629 = vmatprep.mubr.bf16.mxu0 0
        %630 = vmatmul.mubr.bf16.gmra.mrb[0].mxu0 %v592
        %v631 = vpop.f32.mrb[0].mxu0
        %v632 = vadd.f32 %v585, %v631
        %v633 = vpop.f32.mrb[0].mxu0
        %v634 = vpop.f32.mrb[0].mxu0
        %v635 = vpop.f32.mrb[0].mxu0
        %636 = vdwg.mxu0
        %v637 = vsel %vm590, %v632, -inf
        %638 = vmax.xlane.f32.xlu0 %v637
        %v639 = vpop.xlane.xlu0 %638
        %v640 = vsub.f32 %v632, %v639
        %v641 = vmul.f32 %v640, 1.442695
        %v642 = vpow.pop %v641
        %v643 = vsel %vm590, %v642, 0.0
        %644 = vadd.xlane.f32.xlu0 %v643
        %v645 = vpop.xlane.xlu0 %644
        %v646 = vrcp.pop %v645
        %v647 = vmul.f32 %v642, %v646
        %v648 = vpack.c.bf16 %v647, %v647
        %649 = vrot.lane.b32.xlu0 %v580, 112
        %v650 = vpop.permute.xlu0 %649
        %v652 = vsel %vm590, %v648, 0
        %vm654 = vcmask 1043456
        %v656 = vsel %vm654, %v650, 0
        %658 = vmatprep.subr.bf16.mxu0 0
        %659 = vmatpush1.bf16.msra.mxu0 %v656
        %660 = vmatprep.subr.bf16.mxu0 0
        %661 = vmatpush1.bf16.msra.mxu0 0
        %662 = vmatprep.subr.bf16.mxu0 0
        %663 = vmatpush1.bf16.msra.mxu0 0
        %664 = vmatprep.subr.bf16.mxu0 0
        %665 = vmatpush1.bf16.msra.mxu0 0
        %666 = vmatprep.subr.bf16.mxu0 0
        %667 = vmatpush1.bf16.msra.mxu0 0
        %668 = vmatprep.subr.bf16.mxu0 0
        %669 = vmatpush1.bf16.msra.mxu0 0
        %670 = vmatprep.subr.bf16.mxu0 0
        %671 = vmatpush1.bf16.msra.mxu0 0
        %672 = vmatprep.subr.bf16.mxu0 0
        %673 = vmatpush1.bf16.msra.mxu0 0
        %674 = vmatprep.subr.bf16.mxu0 0
        %675 = vmatpush1.bf16.msra.mxu0 0
        %676 = vmatprep.subr.bf16.mxu0 0
        %677 = vmatpush1.bf16.msra.mxu0 0
        %678 = vmatprep.subr.bf16.mxu0 0
        %679 = vmatpush1.bf16.msra.mxu0 0
        %680 = vmatprep.subr.bf16.mxu0 0
        %681 = vmatpush1.bf16.msra.mxu0 0
        %682 = vmatprep.subr.bf16.mxu0 0
        %683 = vmatpush1.bf16.msra.mxu0 0
        %684 = vmatprep.subr.bf16.mxu0 0
        %685 = vmatpush1.bf16.msra.mxu0 0
        %686 = vmatprep.subr.bf16.mxu0 0
        %687 = vmatpush1.bf16.msra.mxu0 0
        %688 = vmatprep.subr.bf16.mxu0 0
        %689 = vmatpush1.bf16.msra.mxu0 0
        %690 = vmatprep.mubr.bf16.mxu0 0
        %691 = vmatmul.mubr.bf16.gmra.mrb[0].mxu0 %v652
        %v692 = vpop.f32.mrb[0].mxu0
        %v693 = vadd.f32 0.0, %v692
        %v694 = vpop.f32.mrb[0].mxu0
        %v695 = vpop.f32.mrb[0].mxu0
        %v696 = vpop.f32.mrb[0].mxu0
        %697 = vdwg.mxu0
        %v698 = vpack.c.bf16 %v693, %v693
        %s699 = scalar_lea.vmem %s477, 16
        %v700 = vld [vmem:[%s699] sm:$0xf]
        %v701 = vld [vmem:[%s699 + $0x4] sm:$0xf]
        %v702 = vld [vmem:[%s699 + $0x8] sm:$0xf]
        %v703 = vld [vmem:[%s699 + $0xc] sm:$0xf]
        %v708 = vunpack.c.l.b16 %v700
        %v709 = vunpack.c.l.b16 %v701
        %v710 = vunpack.c.l.b16 %v702
        %v711 = vunpack.c.l.b16 %v703
        %v712 = vpack.c.b16 %v709, %v708
        %v713 = vpack.c.b16 %v711, %v710
        %717 = vrot.lane.b32.xlu0 %v523, 104
        %v718 = vpop.permute.xlu0 %717
        %720 = vmatprep.subr.bf16.mxu0 0
        %721 = vmatpush1.bf16.msra.mxu0 %v712
        %722 = vmatprep.subr.bf16.mxu0 0
        %723 = vmatpush1.bf16.msra.mxu0 %v713
        %724 = vmatprep.subr.bf16.mxu0 0
        %725 = vmatpush1.bf16.msra.mxu0 0
        %726 = vmatprep.subr.bf16.mxu0 0
        %727 = vmatpush1.bf16.msra.mxu0 0
        %728 = vmatprep.subr.bf16.mxu0 0
        %729 = vmatpush1.bf16.msra.mxu0 0
        %730 = vmatprep.subr.bf16.mxu0 0
        %731 = vmatpush1.bf16.msra.mxu0 0
        %732 = vmatprep.subr.bf16.mxu0 0
        %733 = vmatpush1.bf16.msra.mxu0 0
        %734 = vmatprep.subr.bf16.mxu0 0
        %735 = vmatpush1.bf16.msra.mxu0 0
        %736 = vmatprep.subr.bf16.mxu0 0
        %737 = vmatpush1.bf16.msra.mxu0 0
        %738 = vmatprep.subr.bf16.mxu0 0
        %739 = vmatpush1.bf16.msra.mxu0 0
        %740 = vmatprep.subr.bf16.mxu0 0
        %741 = vmatpush1.bf16.msra.mxu0 0
        %742 = vmatprep.subr.bf16.mxu0 0
        %743 = vmatpush1.bf16.msra.mxu0 0
        %744 = vmatprep.subr.bf16.mxu0 0
        %745 = vmatpush1.bf16.msra.mxu0 0
        %746 = vmatprep.subr.bf16.mxu0 0
        %747 = vmatpush1.bf16.msra.mxu0 0
        %748 = vmatprep.subr.bf16.mxu0 0
        %749 = vmatpush1.bf16.msra.mxu0 0
        %750 = vmatprep.subr.bf16.mxu0 0
        %751 = vmatpush1.bf16.msra.mxu0 0
        %752 = vmatprep.mubr.bf16.mxu0 0
        %753 = vmatmul.mubr.bf16.gmra.mrb[0].mxu0 %v538
        %v754 = vpop.f32.mrb[0].mxu0
        %v755 = vadd.f32 %v718, %v754
        %v756 = vpop.f32.mrb[0].mxu0
        %v757 = vpop.f32.mrb[0].mxu0
        %v758 = vpop.f32.mrb[0].mxu0
        %759 = vdwg.mxu0
        %v760 = vpack.c.bf16 %v755, %v755
        %762 = vrot.lane.b32.xlu0 %v760, 120
        %v763 = vpop.permute.xlu0 %762
        %v765 = vsel %vm590, %v760, 0
        %v768 = vsel %vm590, %v763, 0
        %770 = vmatprep.subr.bf16.mxu0 0
        %771 = vmatpush1.bf16.xpose.msra.mxu0 %v768
        %772 = vmatprep.subr.bf16.mxu0 0
        %773 = vmatpush1.bf16.xpose.msra.mxu0 0
        %774 = vmatprep.subr.bf16.mxu0 0
        %775 = vmatpush1.bf16.xpose.msra.mxu0 0
        %776 = vmatprep.subr.bf16.mxu0 0
        %777 = vmatpush1.bf16.xpose.msra.mxu0 0
        %778 = vmatprep.subr.bf16.mxu0 0
        %779 = vmatpush1.bf16.xpose.msra.mxu0 0
        %780 = vmatprep.subr.bf16.mxu0 0
        %781 = vmatpush1.bf16.xpose.msra.mxu0 0
        %782 = vmatprep.subr.bf16.mxu0 0
        %783 = vmatpush1.bf16.xpose.msra.mxu0 0
        %784 = vmatprep.subr.bf16.mxu0 0
        %785 = vmatpush1.bf16.xpose.msra.mxu0 0
        %786 = vmatprep.subr.bf16.mxu0 0
        %787 = vmatpush1.bf16.xpose.msra.mxu0 0
        %788 = vmatprep.subr.bf16.mxu0 0
        %789 = vmatpush1.bf16.xpose.msra.mxu0 0
        %790 = vmatprep.subr.bf16.mxu0 0
        %791 = vmatpush1.bf16.xpose.msra.mxu0 0
        %792 = vmatprep.subr.bf16.mxu0 0
        %793 = vmatpush1.bf16.xpose.msra.mxu0 0
        %794 = vmatprep.subr.bf16.mxu0 0
        %795 = vmatpush1.bf16.xpose.msra.mxu0 0
        %796 = vmatprep.subr.bf16.mxu0 0
        %797 = vmatpush1.bf16.xpose.msra.mxu0 0
        %798 = vmatprep.subr.bf16.mxu0 0
        %799 = vmatpush1.bf16.xpose.msra.mxu0 0
        %800 = vmatprep.subr.bf16.mxu0 0
        %801 = vmatpush1.bf16.xpose.msra.mxu0 0
        %802 = vmatprep.mubr.bf16.mxu0 0
        %803 = vmatmul.mubr.bf16.gmra.mrb[0].mxu0 %v765
        %v804 = vpop.f32.mrb[0].mxu0
        %v805 = vadd.f32 %v585, %v804
        %v806 = vpop.f32.mrb[0].mxu0
        %v807 = vpop.f32.mrb[0].mxu0
        %v808 = vpop.f32.mrb[0].mxu0
        %809 = vdwg.mxu0
        %v810 = vsel %vm590, %v805, -inf
        %811 = vmax.xlane.f32.xlu0 %v810
        %v812 = vpop.xlane.xlu0 %811
        %v813 = vsub.f32 %v805, %v812
        %v814 = vmul.f32 %v813, 1.442695
        %v815 = vpow.pop %v814
        %v816 = vsel %vm590, %v815, 0.0
        %817 = vadd.xlane.f32.xlu0 %v816
        %v818 = vpop.xlane.xlu0 %817
        %v819 = vrcp.pop %v818
        %v820 = vmul.f32 %v815, %v819
        %v821 = vpack.c.bf16 %v820, %v820
        %822 = vrot.lane.b32.xlu0 %v760, 112
        %v823 = vpop.permute.xlu0 %822
        %v825 = vsel %vm590, %v821, 0
        %v828 = vsel %vm654, %v823, 0
        %830 = vmatprep.subr.bf16.mxu0 0
        %831 = vmatpush1.bf16.msra.mxu0 %v828
        %832 = vmatprep.subr.bf16.mxu0 0
        %833 = vmatpush1.bf16.msra.mxu0 0
        %834 = vmatprep.subr.bf16.mxu0 0
        %835 = vmatpush1.bf16.msra.mxu0 0
        %836 = vmatprep.subr.bf16.mxu0 0
        %837 = vmatpush1.bf16.msra.mxu0 0
        %838 = vmatprep.subr.bf16.mxu0 0
        %839 = vmatpush1.bf16.msra.mxu0 0
        %840 = vmatprep.subr.bf16.mxu0 0
        %841 = vmatpush1.bf16.msra.mxu0 0
        %842 = vmatprep.subr.bf16.mxu0 0
        %843 = vmatpush1.bf16.msra.mxu0 0
        %844 = vmatprep.subr.bf16.mxu0 0
        %845 = vmatpush1.bf16.msra.mxu0 0
        %846 = vmatprep.subr.bf16.mxu0 0
        %847 = vmatpush1.bf16.msra.mxu0 0
        %848 = vmatprep.subr.bf16.mxu0 0
        %849 = vmatpush1.bf16.msra.mxu0 0
        %850 = vmatprep.subr.bf16.mxu0 0
        %851 = vmatpush1.bf16.msra.mxu0 0
        %852 = vmatprep.subr.bf16.mxu0 0
        %853 = vmatpush1.bf16.msra.mxu0 0
        %854 = vmatprep.subr.bf16.mxu0 0
        %855 = vmatpush1.bf16.msra.mxu0 0
        %856 = vmatprep.subr.bf16.mxu0 0
        %857 = vmatpush1.bf16.msra.mxu0 0
        %858 = vmatprep.subr.bf16.mxu0 0
        %859 = vmatpush1.bf16.msra.mxu0 0
        %860 = vmatprep.subr.bf16.mxu0 0
        %861 = vmatpush1.bf16.msra.mxu0 0
        %862 = vmatprep.mubr.bf16.mxu0 0
        %863 = vmatmul.mubr.bf16.gmra.mrb[0].mxu0 %v825
        %v864 = vpop.f32.mrb[0].mxu0
        %v865 = vadd.f32 0.0, %v864
        %v866 = vpop.f32.mrb[0].mxu0
        %v867 = vpop.f32.mrb[0].mxu0
        %v868 = vpop.f32.mrb[0].mxu0
        %869 = vdwg.mxu0
        %v870 = vpack.c.bf16 %v865, %v865
        %s871 = scalar_lea.vmem %s477, 32
        %v872 = vld [vmem:[%s871] sm:$0xf]
        %v873 = vld [vmem:[%s871 + $0x4] sm:$0xf]
        %v874 = vld [vmem:[%s871 + $0x8] sm:$0xf]
        %v875 = vld [vmem:[%s871 + $0xc] sm:$0xf]
        %v880 = vunpack.c.l.b16 %v872
        %v881 = vunpack.c.l.b16 %v873
        %v882 = vunpack.c.l.b16 %v874
        %v883 = vunpack.c.l.b16 %v875
        %v884 = vpack.c.b16 %v881, %v880
        %v885 = vpack.c.b16 %v883, %v882
        %888 = vrot.lane.b32.xlu0 %v523, 80
        %v889 = vpop.permute.xlu0 %888
        %891 = vmatprep.subr.bf16.mxu0 0
        %892 = vmatpush1.bf16.msra.mxu0 %v884
        %893 = vmatprep.subr.bf16.mxu0 0
        %894 = vmatpush1.bf16.msra.mxu0 %v885
        %895 = vmatprep.subr.bf16.mxu0 0
        %896 = vmatpush1.bf16.msra.mxu0 0
        %897 = vmatprep.subr.bf16.mxu0 0
        %898 = vmatpush1.bf16.msra.mxu0 0
        %899 = vmatprep.subr.bf16.mxu0 0
        %900 = vmatpush1.bf16.msra.mxu0 0
        %901 = vmatprep.subr.bf16.mxu0 0
        %902 = vmatpush1.bf16.msra.mxu0 0
        %903 = vmatprep.subr.bf16.mxu0 0
        %904 = vmatpush1.bf16.msra.mxu0 0
        %905 = vmatprep.subr.bf16.mxu0 0
        %906 = vmatpush1.bf16.msra.mxu0 0
        %907 = vmatprep.subr.bf16.mxu0 0
        %908 = vmatpush1.bf16.msra.mxu0 0
        %909 = vmatprep.subr.bf16.mxu0 0
        %910 = vmatpush1.bf16.msra.mxu0 0
        %911 = vmatprep.subr.bf16.mxu0 0
        %912 = vmatpush1.bf16.msra.mxu0 0
        %913 = vmatprep.subr.bf16.mxu0 0
        %914 = vmatpush1.bf16.msra.mxu0 0
        %915 = vmatprep.subr.bf16.mxu0 0
        %916 = vmatpush1.bf16.msra.mxu0 0
        %917 = vmatprep.subr.bf16.mxu0 0
        %918 = vmatpush1.bf16.msra.mxu0 0
        %919 = vmatprep.subr.bf16.mxu0 0
        %920 = vmatpush1.bf16.msra.mxu0 0
        %921 = vmatprep.subr.bf16.mxu0 0
        %922 = vmatpush1.bf16.msra.mxu0 0
        %923 = vmatprep.mubr.bf16.mxu0 0
        %924 = vmatmul.mubr.bf16.gmra.mrb[0].mxu0 %v538
        %v925 = vpop.f32.mrb[0].mxu0
        %v926 = vadd.f32 %v889, %v925
        %v927 = vpop.f32.mrb[0].mxu0
        %v928 = vpop.f32.mrb[0].mxu0
        %v929 = vpop.f32.mrb[0].mxu0
        %930 = vdwg.mxu0
        %v931 = vpack.c.bf16 %v926, %v926
        %933 = vrot.lane.b32.xlu0 %v931, 120
        %v934 = vpop.permute.xlu0 %933
        %v936 = vsel %vm590, %v931, 0
        %v939 = vsel %vm590, %v934, 0
        %941 = vmatprep.subr.bf16.mxu0 0
        %942 = vmatpush1.bf16.xpose.msra.mxu0 %v939
        %943 = vmatprep.subr.bf16.mxu0 0
        %944 = vmatpush1.bf16.xpose.msra.mxu0 0
        %945 = vmatprep.subr.bf16.mxu0 0
        %946 = vmatpush1.bf16.xpose.msra.mxu0 0
        %947 = vmatprep.subr.bf16.mxu0 0
        %948 = vmatpush1.bf16.xpose.msra.mxu0 0
        %949 = vmatprep.subr.bf16.mxu0 0
        %950 = vmatpush1.bf16.xpose.msra.mxu0 0
        %951 = vmatprep.subr.bf16.mxu0 0
        %952 = vmatpush1.bf16.xpose.msra.mxu0 0
        %953 = vmatprep.subr.bf16.mxu0 0
        %954 = vmatpush1.bf16.xpose.msra.mxu0 0
        %955 = vmatprep.subr.bf16.mxu0 0
        %956 = vmatpush1.bf16.xpose.msra.mxu0 0
        %957 = vmatprep.subr.bf16.mxu0 0
        %958 = vmatpush1.bf16.xpose.msra.mxu0 0
        %959 = vmatprep.subr.bf16.mxu0 0
        %960 = vmatpush1.bf16.xpose.msra.mxu0 0
        %961 = vmatprep.subr.bf16.mxu0 0
        %962 = vmatpush1.bf16.xpose.msra.mxu0 0
        %963 = vmatprep.subr.bf16.mxu0 0
        %964 = vmatpush1.bf16.xpose.msra.mxu0 0
        %965 = vmatprep.subr.bf16.mxu0 0
        %966 = vmatpush1.bf16.xpose.msra.mxu0 0
        %967 = vmatprep.subr.bf16.mxu0 0
        %968 = vmatpush1.bf16.xpose.msra.mxu0 0
        %969 = vmatprep.subr.bf16.mxu0 0
        %970 = vmatpush1.bf16.xpose.msra.mxu0 0
        %971 = vmatprep.subr.bf16.mxu0 0
        %972 = vmatpush1.bf16.xpose.msra.mxu0 0
        %973 = vmatprep.mubr.bf16.mxu0 0
        %974 = vmatmul.mubr.bf16.gmra.mrb[0].mxu0 %v936
        %v975 = vpop.f32.mrb[0].mxu0
        %v976 = vadd.f32 %v585, %v975
        %v977 = vpop.f32.mrb[0].mxu0
        %v978 = vpop.f32.mrb[0].mxu0
        %v979 = vpop.f32.mrb[0].mxu0
        %980 = vdwg.mxu0
        %v981 = vsel %vm590, %v976, -inf
        %982 = vmax.xlane.f32.xlu0 %v981
        %v983 = vpop.xlane.xlu0 %982
        %v984 = vsub.f32 %v976, %v983
        %v985 = vmul.f32 %v984, 1.442695
        %v986 = vpow.pop %v985
        %v987 = vsel %vm590, %v986, 0.0
        %988 = vadd.xlane.f32.xlu0 %v987
        %v989 = vpop.xlane.xlu0 %988
        %v990 = vrcp.pop %v989
        %v991 = vmul.f32 %v986, %v990
        %v992 = vpack.c.bf16 %v991, %v991
        %993 = vrot.lane.b32.xlu0 %v931, 112
        %v994 = vpop.permute.xlu0 %993
        %v996 = vsel %vm590, %v992, 0
        %v999 = vsel %vm654, %v994, 0
        %1001 = vmatprep.subr.bf16.mxu0 0
        %1002 = vmatpush1.bf16.msra.mxu0 %v999
        %1003 = vmatprep.subr.bf16.mxu0 0
        %1004 = vmatpush1.bf16.msra.mxu0 0
        %1005 = vmatprep.subr.bf16.mxu0 0
        %1006 = vmatpush1.bf16.msra.mxu0 0
        %1007 = vmatprep.subr.bf16.mxu0 0
        %1008 = vmatpush1.bf16.msra.mxu0 0
        %1009 = vmatprep.subr.bf16.mxu0 0
        %1010 = vmatpush1.bf16.msra.mxu0 0
        %1011 = vmatprep.subr.bf16.mxu0 0
        %1012 = vmatpush1.bf16.msra.mxu0 0
        %1013 = vmatprep.subr.bf16.mxu0 0
        %1014 = vmatpush1.bf16.msra.mxu0 0
        %1015 = vmatprep.subr.bf16.mxu0 0
        %1016 = vmatpush1.bf16.msra.mxu0 0
        %1017 = vmatprep.subr.bf16.mxu0 0
        %1018 = vmatpush1.bf16.msra.mxu0 0
        %1019 = vmatprep.subr.bf16.mxu0 0
        %1020 = vmatpush1.bf16.msra.mxu0 0
        %1021 = vmatprep.subr.bf16.mxu0 0
        %1022 = vmatpush1.bf16.msra.mxu0 0
        %1023 = vmatprep.subr.bf16.mxu0 0
        %1024 = vmatpush1.bf16.msra.mxu0 0
        %1025 = vmatprep.subr.bf16.mxu0 0
        %1026 = vmatpush1.bf16.msra.mxu0 0
        %1027 = vmatprep.subr.bf16.mxu0 0
        %1028 = vmatpush1.bf16.msra.mxu0 0
        %1029 = vmatprep.subr.bf16.mxu0 0
        %1030 = vmatpush1.bf16.msra.mxu0 0
        %1031 = vmatprep.subr.bf16.mxu0 0
        %1032 = vmatpush1.bf16.msra.mxu0 0
        %1033 = vmatprep.mubr.bf16.mxu0 0
        %1034 = vmatmul.mubr.bf16.gmra.mrb[0].mxu0 %v996
        %v1035 = vpop.f32.mrb[0].mxu0
        %v1036 = vadd.f32 0.0, %v1035
        %v1037 = vpop.f32.mrb[0].mxu0
        %v1038 = vpop.f32.mrb[0].mxu0
        %v1039 = vpop.f32.mrb[0].mxu0
        %1040 = vdwg.mxu0
        %v1041 = vpack.c.bf16 %v1036, %v1036
        %s1042 = scalar_lea.vmem %s477, 48
        %v1043 = vld [vmem:[%s1042] sm:$0xf]
        %v1044 = vld [vmem:[%s1042 + $0x4] sm:$0xf]
        %v1045 = vld [vmem:[%s1042 + $0x8] sm:$0xf]
        %v1046 = vld [vmem:[%s1042 + $0xc] sm:$0xf]
        %v1051 = vunpack.c.l.b16 %v1043
        %v1052 = vunpack.c.l.b16 %v1044
        %v1053 = vunpack.c.l.b16 %v1045
        %v1054 = vunpack.c.l.b16 %v1046
        %v1055 = vpack.c.b16 %v1052, %v1051
        %v1056 = vpack.c.b16 %v1054, %v1053
        %1059 = vrot.lane.b32.xlu0 %v523, 56
        %v1060 = vpop.permute.xlu0 %1059
        %1062 = vmatprep.subr.bf16.mxu0 0
        %1063 = vmatpush1.bf16.msra.mxu0 %v1055
        %1064 = vmatprep.subr.bf16.mxu0 0
        %1065 = vmatpush1.bf16.msra.mxu0 %v1056
        %1066 = vmatprep.subr.bf16.mxu0 0
        %1067 = vmatpush1.bf16.msra.mxu0 0
        %1068 = vmatprep.subr.bf16.mxu0 0
        %1069 = vmatpush1.bf16.msra.mxu0 0
        %1070 = vmatprep.subr.bf16.mxu0 0
        %1071 = vmatpush1.bf16.msra.mxu0 0
        %1072 = vmatprep.subr.bf16.mxu0 0
        %1073 = vmatpush1.bf16.msra.mxu0 0
        %1074 = vmatprep.subr.bf16.mxu0 0
        %1075 = vmatpush1.bf16.msra.mxu0 0
        %1076 = vmatprep.subr.bf16.mxu0 0
        %1077 = vmatpush1.bf16.msra.mxu0 0
        %1078 = vmatprep.subr.bf16.mxu0 0
        %1079 = vmatpush1.bf16.msra.mxu0 0
        %1080 = vmatprep.subr.bf16.mxu0 0
        %1081 = vmatpush1.bf16.msra.mxu0 0
        %1082 = vmatprep.subr.bf16.mxu0 0
        %1083 = vmatpush1.bf16.msra.mxu0 0
        %1084 = vmatprep.subr.bf16.mxu0 0
        %1085 = vmatpush1.bf16.msra.mxu0 0
        %1086 = vmatprep.subr.bf16.mxu0 0
        %1087 = vmatpush1.bf16.msra.mxu0 0
        %1088 = vmatprep.subr.bf16.mxu0 0
        %1089 = vmatpush1.bf16.msra.mxu0 0
        %1090 = vmatprep.subr.bf16.mxu0 0
        %1091 = vmatpush1.bf16.msra.mxu0 0
        %1092 = vmatprep.subr.bf16.mxu0 0
        %1093 = vmatpush1.bf16.msra.mxu0 0
        %1094 = vmatprep.mubr.bf16.mxu0 0
        %1095 = vmatmul.mubr.bf16.gmra.mrb[0].mxu0 %v538
        %v1096 = vpop.f32.mrb[0].mxu0
        %v1097 = vadd.f32 %v1060, %v1096
        %v1098 = vpop.f32.mrb[0].mxu0
        %v1099 = vpop.f32.mrb[0].mxu0
        %v1100 = vpop.f32.mrb[0].mxu0
        %1101 = vdwg.mxu0
        %v1102 = vpack.c.bf16 %v1097, %v1097
        %1104 = vrot.lane.b32.xlu0 %v1102, 120
        %v1105 = vpop.permute.xlu0 %1104
        %v1107 = vsel %vm590, %v1102, 0
        %v1110 = vsel %vm590, %v1105, 0
        %1112 = vmatprep.subr.bf16.mxu0 0
        %1113 = vmatpush1.bf16.xpose.msra.mxu0 %v1110
        %1114 = vmatprep.subr.bf16.mxu0 0
        %1115 = vmatpush1.bf16.xpose.msra.mxu0 0
        %1116 = vmatprep.subr.bf16.mxu0 0
        %1117 = vmatpush1.bf16.xpose.msra.mxu0 0
        %1118 = vmatprep.subr.bf16.mxu0 0
        %1119 = vmatpush1.bf16.xpose.msra.mxu0 0
        %1120 = vmatprep.subr.bf16.mxu0 0
        %1121 = vmatpush1.bf16.xpose.msra.mxu0 0
        %1122 = vmatprep.subr.bf16.mxu0 0
        %1123 = vmatpush1.bf16.xpose.msra.mxu0 0
        %1124 = vmatprep.subr.bf16.mxu0 0
        %1125 = vmatpush1.bf16.xpose.msra.mxu0 0
        %1126 = vmatprep.subr.bf16.mxu0 0
        %1127 = vmatpush1.bf16.xpose.msra.mxu0 0
        %1128 = vmatprep.subr.bf16.mxu0 0
        %1129 = vmatpush1.bf16.xpose.msra.mxu0 0
        %1130 = vmatprep.subr.bf16.mxu0 0
        %1131 = vmatpush1.bf16.xpose.msra.mxu0 0
        %1132 = vmatprep.subr.bf16.mxu0 0
        %1133 = vmatpush1.bf16.xpose.msra.mxu0 0
        %1134 = vmatprep.subr.bf16.mxu0 0
        %1135 = vmatpush1.bf16.xpose.msra.mxu0 0
        %1136 = vmatprep.subr.bf16.mxu0 0
        %1137 = vmatpush1.bf16.xpose.msra.mxu0 0
        %1138 = vmatprep.subr.bf16.mxu0 0
        %1139 = vmatpush1.bf16.xpose.msra.mxu0 0
        %1140 = vmatprep.subr.bf16.mxu0 0
        %1141 = vmatpush1.bf16.xpose.msra.mxu0 0
        %1142 = vmatprep.subr.bf16.mxu0 0
        %1143 = vmatpush1.bf16.xpose.msra.mxu0 0
        %1144 = vmatprep.mubr.bf16.mxu0 0
        %1145 = vmatmul.mubr.bf16.gmra.mrb[0].mxu0 %v1107
        %v1146 = vpop.f32.mrb[0].mxu0
        %v1147 = vadd.f32 %v585, %v1146
        %v1148 = vpop.f32.mrb[0].mxu0
        %v1149 = vpop.f32.mrb[0].mxu0
        %v1150 = vpop.f32.mrb[0].mxu0
        %1151 = vdwg.mxu0
        %v1152 = vsel %vm590, %v1147, -inf
        %1153 = vmax.xlane.f32.xlu0 %v1152
        %v1154 = vpop.xlane.xlu0 %1153
        %v1155 = vsub.f32 %v1147, %v1154
        %v1156 = vmul.f32 %v1155, 1.442695
        %v1157 = vpow.pop %v1156
        %v1158 = vsel %vm590, %v1157, 0.0
        %1159 = vadd.xlane.f32.xlu0 %v1158
        %v1160 = vpop.xlane.xlu0 %1159
        %v1161 = vrcp.pop %v1160
        %v1162 = vmul.f32 %v1157, %v1161
        %v1163 = vpack.c.bf16 %v1162, %v1162
        %1164 = vrot.lane.b32.xlu0 %v1102, 112
        %v1165 = vpop.permute.xlu0 %1164
        %v1167 = vsel %vm590, %v1163, 0
        %v1170 = vsel %vm654, %v1165, 0
        %1172 = vmatprep.subr.bf16.mxu0 0
        %1173 = vmatpush1.bf16.msra.mxu0 %v1170
        %1174 = vmatprep.subr.bf16.mxu0 0
        %1175 = vmatpush1.bf16.msra.mxu0 0
        %1176 = vmatprep.subr.bf16.mxu0 0
        %1177 = vmatpush1.bf16.msra.mxu0 0
        %1178 = vmatprep.subr.bf16.mxu0 0
        %1179 = vmatpush1.bf16.msra.mxu0 0
        %1180 = vmatprep.subr.bf16.mxu0 0
        %1181 = vmatpush1.bf16.msra.mxu0 0
        %1182 = vmatprep.subr.bf16.mxu0 0
        %1183 = vmatpush1.bf16.msra.mxu0 0
        %1184 = vmatprep.subr.bf16.mxu0 0
        %1185 = vmatpush1.bf16.msra.mxu0 0
        %1186 = vmatprep.subr.bf16.mxu0 0
        %1187 = vmatpush1.bf16.msra.mxu0 0
        %1188 = vmatprep.subr.bf16.mxu0 0
        %1189 = vmatpush1.bf16.msra.mxu0 0
        %1190 = vmatprep.subr.bf16.mxu0 0
        %1191 = vmatpush1.bf16.msra.mxu0 0
        %1192 = vmatprep.subr.bf16.mxu0 0
        %1193 = vmatpush1.bf16.msra.mxu0 0
        %1194 = vmatprep.subr.bf16.mxu0 0
        %1195 = vmatpush1.bf16.msra.mxu0 0
        %1196 = vmatprep.subr.bf16.mxu0 0
        %1197 = vmatpush1.bf16.msra.mxu0 0
        %1198 = vmatprep.subr.bf16.mxu0 0
        %1199 = vmatpush1.bf16.msra.mxu0 0
        %1200 = vmatprep.subr.bf16.mxu0 0
        %1201 = vmatpush1.bf16.msra.mxu0 0
        %1202 = vmatprep.subr.bf16.mxu0 0
        %1203 = vmatpush1.bf16.msra.mxu0 0
        %1204 = vmatprep.mubr.bf16.mxu0 0
        %1205 = vmatmul.mubr.bf16.gmra.mrb[0].mxu0 %v1167
        %v1206 = vpop.f32.mrb[0].mxu0
        %v1207 = vadd.f32 0.0, %v1206
        %v1208 = vpop.f32.mrb[0].mxu0
        %v1209 = vpop.f32.mrb[0].mxu0
        %v1210 = vpop.f32.mrb[0].mxu0
        %1211 = vdwg.mxu0
        %v1212 = vpack.c.bf16 %v1207, %v1207
        %1214 = vrot.lane.b32.xlu0 %v870, 8
        %v1215 = vpop.permute.xlu0 %1214
        %1217 = vrot.lane.b32.xlu0 %v1041, 16
        %v1218 = vpop.permute.xlu0 %1217
        %1220 = vrot.lane.b32.xlu0 %v1212, 24
        %v1221 = vpop.permute.xlu0 %1220
        %v1224 = vsel %vm590, %v698, %v1215
        %vm1225 = vcmask 130048
        %v1227 = vsel %vm1225, %v1224, %v1218
        %vm1228 = vcmask 195584
        %v1230 = vsel %vm1228, %v1227, %v1221
        %v1231 = vld [vmem:[%s482] sm:$0xf]
        %v1232 = vld [vmem:[%s482 + $0x4] sm:$0xf]
        %v1233 = vld [vmem:[%s482 + $0x8] sm:$0xf]
        %v1234 = vld [vmem:[%s482 + $0xc] sm:$0xf]
        %v1235 = vlaneseq
        %v1236 = vshrl.u32 %v1235, 7
        %v1237 = vsub.s32 1, %v1236
        %v1238 = vrot.slane %v513, %v1237
        %v1243 = vunpack.c.l.b16 %v1231
        %v1244 = vunpack.c.l.b16 %v1232
        %v1245 = vunpack.c.l.b16 %v1233
        %v1246 = vunpack.c.l.b16 %v1234
        %v1247 = vpack.c.b16 %v1244, %v1243
        %v1248 = vpack.c.b16 %v1246, %v1245
        %v1251 = vsel %vm536, %v1230, 0
        %1253 = vmatprep.subr.bf16.mxu0 0
        %1254 = vmatpush1.bf16.msra.mxu0 %v1247
        %1255 = vmatprep.subr.bf16.mxu0 0
        %1256 = vmatpush1.bf16.msra.mxu0 %v1248
        %1257 = vmatprep.subr.bf16.mxu0 0
        %1258 = vmatpush1.bf16.msra.mxu0 0
        %1259 = vmatprep.subr.bf16.mxu0 0
        %1260 = vmatpush1.bf16.msra.mxu0 0
        %1261 = vmatprep.subr.bf16.mxu0 0
        %1262 = vmatpush1.bf16.msra.mxu0 0
        %1263 = vmatprep.subr.bf16.mxu0 0
        %1264 = vmatpush1.bf16.msra.mxu0 0
        %1265 = vmatprep.subr.bf16.mxu0 0
        %1266 = vmatpush1.bf16.msra.mxu0 0
        %1267 = vmatprep.subr.bf16.mxu0 0
        %1268 = vmatpush1.bf16.msra.mxu0 0
        %1269 = vmatprep.subr.bf16.mxu0 0
        %1270 = vmatpush1.bf16.msra.mxu0 0
        %1271 = vmatprep.subr.bf16.mxu0 0
        %1272 = vmatpush1.bf16.msra.mxu0 0
        %1273 = vmatprep.subr.bf16.mxu0 0
        %1274 = vmatpush1.bf16.msra.mxu0 0
        %1275 = vmatprep.subr.bf16.mxu0 0
        %1276 = vmatpush1.bf16.msra.mxu0 0
        %1277 = vmatprep.subr.bf16.mxu0 0
        %1278 = vmatpush1.bf16.msra.mxu0 0
        %1279 = vmatprep.subr.bf16.mxu0 0
        %1280 = vmatpush1.bf16.msra.mxu0 0
        %1281 = vmatprep.subr.bf16.mxu0 0
        %1282 = vmatpush1.bf16.msra.mxu0 0
        %1283 = vmatprep.subr.bf16.mxu0 0
        %1284 = vmatpush1.bf16.msra.mxu0 0
        %1285 = vmatprep.mubr.bf16.mxu0 0
        %1286 = vmatmul.mubr.bf16.gmra.mrb[0].mxu0 %v1251
        %v1287 = vpop.f32.mrb[0].mxu0
        %v1288 = vadd.f32 %v1238, %v1287
        %v1289 = vpop.f32.mrb[0].mxu0
        %v1290 = vpop.f32.mrb[0].mxu0
        %v1291 = vpop.f32.mrb[0].mxu0
        %1292 = vdwg.mxu0
        %v1293 = vpack.c.bf16 %v1288, %v1288
        %v1294 = vld [vmem:[%s487] sm:$0xf]
        %v1295 = vld [vmem:[%s487 + $0x4] sm:$0xf]
        %v1296 = vld [vmem:[%s487 + $0x8] sm:$0xf]
        %v1297 = vld [vmem:[%s487 + $0xc] sm:$0xf]
        %v1298 = vlaneseq
        %v1299 = vshrl.u32 %v1298, 7
        %v1300 = vsub.s32 2, %v1299
        %v1301 = vrot.slane %v513, %v1300
        %v1306 = vunpack.c.l.b16 %v1294
        %v1307 = vunpack.c.l.b16 %v1295
        %v1308 = vunpack.c.l.b16 %v1296
        %v1309 = vunpack.c.l.b16 %v1297
        %v1310 = vpack.c.b16 %v1307, %v1306
        %v1311 = vpack.c.b16 %v1309, %v1308
        %v1315 = vsel %vm536, %v1293, 0
        %1317 = vmatprep.subr.bf16.mxu0 0
        %1318 = vmatpush1.bf16.msra.mxu0 %v1310
        %1319 = vmatprep.subr.bf16.mxu0 0
        %1320 = vmatpush1.bf16.msra.mxu0 %v1311
        %1321 = vmatprep.subr.bf16.mxu0 0
        %1322 = vmatpush1.bf16.msra.mxu0 0
        %1323 = vmatprep.subr.bf16.mxu0 0
        %1324 = vmatpush1.bf16.msra.mxu0 0
        %1325 = vmatprep.subr.bf16.mxu0 0
        %1326 = vmatpush1.bf16.msra.mxu0 0
        %1327 = vmatprep.subr.bf16.mxu0 0
        %1328 = vmatpush1.bf16.msra.mxu0 0
        %1329 = vmatprep.subr.bf16.mxu0 0
        %1330 = vmatpush1.bf16.msra.mxu0 0
        %1331 = vmatprep.subr.bf16.mxu0 0
        %1332 = vmatpush1.bf16.msra.mxu0 0
        %1333 = vmatprep.subr.bf16.mxu0 0
        %1334 = vmatpush1.bf16.msra.mxu0 0
        %1335 = vmatprep.subr.bf16.mxu0 0
        %1336 = vmatpush1.bf16.msra.mxu0 0
        %1337 = vmatprep.subr.bf16.mxu0 0
        %1338 = vmatpush1.bf16.msra.mxu0 0
        %1339 = vmatprep.subr.bf16.mxu0 0
        %1340 = vmatpush1.bf16.msra.mxu0 0
        %1341 = vmatprep.subr.bf16.mxu0 0
        %1342 = vmatpush1.bf16.msra.mxu0 0
        %1343 = vmatprep.subr.bf16.mxu0 0
        %1344 = vmatpush1.bf16.msra.mxu0 0
        %1345 = vmatprep.subr.bf16.mxu0 0
        %1346 = vmatpush1.bf16.msra.mxu0 0
        %1347 = vmatprep.subr.bf16.mxu0 0
        %1348 = vmatpush1.bf16.msra.mxu0 0
        %1349 = vmatprep.mubr.bf16.mxu0 0
        %1350 = vmatmul.mubr.bf16.gmra.mrb[0].mxu0 %v1315
        %v1351 = vpop.f32.mrb[0].mxu0
        %v1352 = vadd.f32 %v1301, %v1351
        %v1353 = vpop.f32.mrb[0].mxu0
        %v1354 = vpop.f32.mrb[0].mxu0
        %v1355 = vpop.f32.mrb[0].mxu0
        %1356 = vdwg.mxu0
        %v1357 = vadd.f32 %v1352, %v512
        %v1358 = vsel %vm536, %v1357, 0.0
        %1359 = vadd.xlane.f32.xlu0 %v1358
        %v1360 = vpop.xlane.xlu0 %1359
        %v1361 = vrcp.pop 32.0
        %v1362 = vmul.f32 %v1360, %v1361
        %v1363 = vsub.f32 %v1357, %v1362
        %v1364 = vmul.f32 %v1363, %v1363
        %v1365 = vsel %vm536, %v1364, 0.0
        %1366 = vadd.xlane.f32.xlu0 %v1365
        %v1367 = vpop.xlane.xlu0 %1366
        %v1368 = vmul.f32 %v1367, %v1361
        %v1369 = vadd.f32 %v1368, 1e-12
        %v1370 = vrsqrt.pop %v1369
        %v1371 = vmul.f32 %v1363, %v1370
        %v1372 = vlaneseq
        %v1373 = vshrl.u32 %v1372, 7
        %v1374 = vsub.s32 3, %v1373
        %v1375 = vrot.slane %v513, %v1374
        %v1376 = vmul.f32 %v1371, %v1375
        %v1377 = vlaneseq
        %v1378 = vshrl.u32 %v1377, 7
        %v1379 = vsub.s32 4, %v1378
        %v1380 = vrot.slane %v513, %v1379
        %v1381 = vadd.f32 %v1376, %v1380
        %v1382 = vpack.c.bf16 %v1381, %v1381
        %v1383 = vld [vmem:[%s492] sm:$0xf]
        %v1384 = vld [vmem:[%s492 + $0x4] sm:$0xf]
        %v1385 = vld [vmem:[%s492 + $0x8] sm:$0xf]
        %v1386 = vld [vmem:[%s492 + $0xc] sm:$0xf]
        %v1387 = vlaneseq
        %v1388 = vshrl.u32 %v1387, 7
        %v1389 = vsub.s32 5, %v1388
        %v1390 = vrot.slane %v513, %v1389
        %v1395 = vunpack.c.l.b16 %v1383
        %v1396 = vunpack.c.l.b16 %v1384
        %v1397 = vunpack.c.l.b16 %v1385
        %v1398 = vunpack.c.l.b16 %v1386
        %v1399 = vpack.c.b16 %v1396, %v1395
        %v1400 = vpack.c.b16 %v1398, %v1397
        %v1404 = vsel %vm536, %v1382, 0
        %1406 = vmatprep.subr.bf16.mxu0 0
        %1407 = vmatpush1.bf16.msra.mxu0 %v1399
        %1408 = vmatprep.subr.bf16.mxu0 0
        %1409 = vmatpush1.bf16.msra.mxu0 %v1400
        %1410 = vmatprep.subr.bf16.mxu0 0
        %1411 = vmatpush1.bf16.msra.mxu0 0
        %1412 = vmatprep.subr.bf16.mxu0 0
        %1413 = vmatpush1.bf16.msra.mxu0 0
        %1414 = vmatprep.subr.bf16.mxu0 0
        %1415 = vmatpush1.bf16.msra.mxu0 0
        %1416 = vmatprep.subr.bf16.mxu0 0
        %1417 = vmatpush1.bf16.msra.mxu0 0
        %1418 = vmatprep.subr.bf16.mxu0 0
        %1419 = vmatpush1.bf16.msra.mxu0 0
        %1420 = vmatprep.subr.bf16.mxu0 0
        %1421 = vmatpush1.bf16.msra.mxu0 0
        %1422 = vmatprep.subr.bf16.mxu0 0
        %1423 = vmatpush1.bf16.msra.mxu0 0
        %1424 = vmatprep.subr.bf16.mxu0 0
        %1425 = vmatpush1.bf16.msra.mxu0 0
        %1426 = vmatprep.subr.bf16.mxu0 0
        %1427 = vmatpush1.bf16.msra.mxu0 0
        %1428 = vmatprep.subr.bf16.mxu0 0
        %1429 = vmatpush1.bf16.msra.mxu0 0
        %1430 = vmatprep.subr.bf16.mxu0 0
        %1431 = vmatpush1.bf16.msra.mxu0 0
        %1432 = vmatprep.subr.bf16.mxu0 0
        %1433 = vmatpush1.bf16.msra.mxu0 0
        %1434 = vmatprep.subr.bf16.mxu0 0
        %1435 = vmatpush1.bf16.msra.mxu0 0
        %1436 = vmatprep.subr.bf16.mxu0 0
        %1437 = vmatpush1.bf16.msra.mxu0 0
        %1438 = vmatprep.mubr.bf16.mxu0 0
        %1439 = vmatmul.mubr.bf16.gmra.mrb[0].mxu0 %v1404
        %v1440 = vpop.f32.mrb[0].mxu0
        %v1441 = vadd.f32 %v1390, %v1440
        %v1442 = vpop.f32.mrb[0].mxu0
        %v1443 = vpop.f32.mrb[0].mxu0
        %v1444 = vpop.f32.mrb[0].mxu0
        %1445 = vdwg.mxu0
        %v1446 = vmul.f32 %v1441, 0.5
        %v1447 = vmul.f32 %v1441, 0.044715
        %v1448 = vmul.f32 %v1447, %v1441
        %v1449 = vmul.f32 %v1448, %v1441
        %v1450 = vadd.f32 %v1441, %v1449
        %v1451 = vmul.f32 %v1450, 0.7978845
        %v1452 = vtanh.pop %v1451
        %v1453 = vadd.f32 %v1452, 1.0
        %v1454 = vmul.f32 %v1446, %v1453
        %v1455 = vpack.c.bf16 %v1454, %v1454
        %v1456 = vld [vmem:[%s497] sm:$0xf]
        %v1457 = vld [vmem:[%s497 + $0x4] sm:$0xf]
        %v1458 = vld [vmem:[%s497 + $0x8] sm:$0xf]
        %v1459 = vld [vmem:[%s497 + $0xc] sm:$0xf]
        %v1460 = vld [vmem:[%s497 + $0x10] sm:$0xf]
        %v1461 = vld [vmem:[%s497 + $0x14] sm:$0xf]
        %v1462 = vld [vmem:[%s497 + $0x18] sm:$0xf]
        %v1463 = vld [vmem:[%s497 + $0x1c] sm:$0xf]
        %v1464 = vlaneseq
        %v1465 = vshrl.u32 %v1464, 7
        %v1466 = vsub.s32 6, %v1465
        %v1467 = vrot.slane %v513, %v1466
        %v1476 = vunpack.c.l.b16 %v1456
        %v1477 = vunpack.c.l.b16 %v1457
        %v1478 = vunpack.c.l.b16 %v1458
        %v1479 = vunpack.c.l.b16 %v1459
        %v1480 = vunpack.c.l.b16 %v1460
        %v1481 = vunpack.c.l.b16 %v1461
        %v1482 = vunpack.c.l.b16 %v1462
        %v1483 = vunpack.c.l.b16 %v1463
        %v1484 = vpack.c.b16 %v1477, %v1476
        %v1485 = vpack.c.b16 %v1479, %v1478
        %v1486 = vpack.c.b16 %v1481, %v1480
        %v1487 = vpack.c.b16 %v1483, %v1482
        %vm1492 = vcmask 523264
        %v1494 = vsel %vm1492, %v1455, 0
        %1496 = vmatprep.subr.bf16.mxu0 0
        %1497 = vmatpush1.bf16.msra.mxu0 %v1484
        %1498 = vmatprep.subr.bf16.mxu0 0
        %1499 = vmatpush1.bf16.msra.mxu0 %v1485
        %1500 = vmatprep.subr.bf16.mxu0 0
        %1501 = vmatpush1.bf16.msra.mxu0 %v1486
        %1502 = vmatprep.subr.bf16.mxu0 0
        %1503 = vmatpush1.bf16.msra.mxu0 %v1487
        %1504 = vmatprep.subr.bf16.mxu0 0
        %1505 = vmatpush1.bf16.msra.mxu0 0
        %1506 = vmatprep.subr.bf16.mxu0 0
        %1507 = vmatpush1.bf16.msra.mxu0 0
        %1508 = vmatprep.subr.bf16.mxu0 0
        %1509 = vmatpush1.bf16.msra.mxu0 0
        %1510 = vmatprep.subr.bf16.mxu0 0
        %1511 = vmatpush1.bf16.msra.mxu0 0
        %1512 = vmatprep.subr.bf16.mxu0 0
        %1513 = vmatpush1.bf16.msra.mxu0 0
        %1514 = vmatprep.subr.bf16.mxu0 0
        %1515 = vmatpush1.bf16.msra.mxu0 0
        %1516 = vmatprep.subr.bf16.mxu0 0
        %1517 = vmatpush1.bf16.msra.mxu0 0
        %1518 = vmatprep.subr.bf16.mxu0 0
        %1519 = vmatpush1.bf16.msra.mxu0 0
        %1520 = vmatprep.subr.bf16.mxu0 0
        %1521 = vmatpush1.bf16.msra.mxu0 0
        %1522 = vmatprep.subr.bf16.mxu0 0
        %1523 = vmatpush1.bf16.msra.mxu0 0
        %1524 = vmatprep.subr.bf16.mxu0 0
        %1525 = vmatpush1.bf16.msra.mxu0 0
        %1526 = vmatprep.subr.bf16.mxu0 0
        %1527 = vmatpush1.bf16.msra.mxu0 0
        %1528 = vmatprep.mubr.bf16.mxu0 0
        %1529 = vmatmul.mubr.bf16.gmra.mrb[0].mxu0 %v1494
        %v1530 = vpop.f32.mrb[0].mxu0
        %v1531 = vadd.f32 %v1467, %v1530
        %v1532 = vpop.f32.mrb[0].mxu0
        %v1533 = vpop.f32.mrb[0].mxu0
        %v1534 = vpop.f32.mrb[0].mxu0
        %1535 = vdwg.mxu0
        %v1536 = vadd.f32 %v1531, %v1381
        %v1537 = vsel %vm536, %v1536, 0.0
        %1538 = vadd.xlane.f32.xlu0 %v1537
        %v1539 = vpop.xlane.xlu0 %1538
        %v1540 = vmul.f32 %v1539, %v1361
        %v1541 = vsub.f32 %v1536, %v1540
        %v1542 = vmul.f32 %v1541, %v1541
        %v1543 = vsel %vm536, %v1542, 0.0
        %1544 = vadd.xlane.f32.xlu0 %v1543
        %v1545 = vpop.xlane.xlu0 %1544
        %v1546 = vmul.f32 %v1545, %v1361
        %v1547 = vadd.f32 %v1546, 1e-12
        %v1548 = vrsqrt.pop %v1547
        %v1549 = vmul.f32 %v1541, %v1548
        %v1550 = vlaneseq
        %v1551 = vshrl.u32 %v1550, 7
        %v1552 = vsub.s32 7, %v1551
        %v1553 = vrot.slane %v513, %v1552
        %v1554 = vmul.f32 %v1549, %v1553
        %v1555 = vlaneseq
        %v1556 = vshrl.u32 %v1555, 7
        %v1557 = vsub.s32 0, %v1556
        %v1558 = vrot.slane %v514, %v1557
        %v1559 = vadd.f32 %v1554, %v1558
        %v1560 = vpack.c.bf16 %v1559, %v1559
        %v1561 = vld [vmem:[%s8] sm:$0xf]
        %v1562 = vld [vmem:[%s8 + $0x4] sm:$0xf]
        %v1563 = vld [vmem:[%s8 + $0x8] sm:$0xf]
        %v1564 = vld [vmem:[%s8 + $0xc] sm:$0xf]
        %v1565 = vld [vmem:[%s9] sm:$0x1]
        %v1567 = vlaneseq
        %v1568 = vshrl.u32 %v1567, 7
        %v1569 = vsub.s32 0, %v1568
        %v1570 = vrot.slane %v1565, %v1569
        %v1576 = vunpack.c.l.b16 %v1561
        %v1577 = vunpack.c.l.b16 %v1562
        %v1578 = vunpack.c.l.b16 %v1563
        %v1579 = vunpack.c.l.b16 %v1564
        %v1580 = vpack.c.b16 %v1577, %v1576
        %v1581 = vpack.c.b16 %v1579, %v1578
        %v1585 = vsel %vm536, %v1560, 0
        %1587 = vmatprep.subr.bf16.mxu0 0
        %1588 = vmatpush1.bf16.msra.mxu0 %v1580
        %1589 = vmatprep.subr.bf16.mxu0 0
        %1590 = vmatpush1.bf16.msra.mxu0 %v1581
        %1591 = vmatprep.subr.bf16.mxu0 0
        %1592 = vmatpush1.bf16.msra.mxu0 0
        %1593 = vmatprep.subr.bf16.mxu0 0
        %1594 = vmatpush1.bf16.msra.mxu0 0
        %1595 = vmatprep.subr.bf16.mxu0 0
        %1596 = vmatpush1.bf16.msra.mxu0 0
        %1597 = vmatprep.subr.bf16.mxu0 0
        %1598 = vmatpush1.bf16.msra.mxu0 0
        %1599 = vmatprep.subr.bf16.mxu0 0
        %1600 = vmatpush1.bf16.msra.mxu0 0
        %1601 = vmatprep.subr.bf16.mxu0 0
        %1602 = vmatpush1.bf16.msra.mxu0 0
        %1603 = vmatprep.subr.bf16.mxu0 0
        %1604 = vmatpush1.bf16.msra.mxu0 0
        %1605 = vmatprep.subr.bf16.mxu0 0
        %1606 = vmatpush1.bf16.msra.mxu0 0
        %1607 = vmatprep.subr.bf16.mxu0 0
        %1608 = vmatpush1.bf16.msra.mxu0 0
        %1609 = vmatprep.subr.bf16.mxu0 0
        %1610 = vmatpush1.bf16.msra.mxu0 0
        %1611 = vmatprep.subr.bf16.mxu0 0
        %1612 = vmatpush1.bf16.msra.mxu0 0
        %1613 = vmatprep.subr.bf16.mxu0 0
        %1614 = vmatpush1.bf16.msra.mxu0 0
        %1615 = vmatprep.subr.bf16.mxu0 0
        %1616 = vmatpush1.bf16.msra.mxu0 0
        %1617 = vmatprep.subr.bf16.mxu0 0
        %1618 = vmatpush1.bf16.msra.mxu0 0
        %1619 = vmatprep.mubr.bf16.mxu0 0
        %1620 = vmatmul.mubr.bf16.gmra.mrb[0].mxu0 %v1585
        %v1621 = vpop.f32.mrb[0].mxu0
        %v1622 = vadd.f32 %v1570, %v1621
        %v1623 = vpop.f32.mrb[0].mxu0
        %v1624 = vpop.f32.mrb[0].mxu0
        %v1625 = vpop.f32.mrb[0].mxu0
        %1626 = vdwg.mxu0
        %vm1627 = vcmask 257024
        %1628 = vst.msk [vmem:[#allocation2] sm:$0xf] %vm1627, %v1560
        %v1629 = vpack.c.bf16 %v1622, %v1622
        %vm1630 = vcmask 125952
        %1631 = vst.msk [vmem:[%s465] sm:$0xf] %vm1630, %v1629
        %s1632 = sand.u32 %s296, 1
        %s1633 = scalar_lea.sflag [#allocation4], %s1632
        %s1634 = sand.u32 %s296, 1
        %s1635 = smul.addr %s1634, 4
        %s1636 = scalar_lea.vmem [#allocation3], %s1635
        // Predicated region
        $region65: #{tpu_custom_call.1} parent=59 // pred_check
          %p1637 = pneg %p306
        $region66: #{tpu_custom_call.1} parent=59 // pred_check_branch
          %1639 = sbr.rel (%p1637) target = $region68
        $region67: #{tpu_custom_call.1} parent=59 // pred_region
          %s1641 = ssub.s32 64, 64
          %1642 = vsyncadd %s1633, %s1641
          %s1643 = smul.addr %s29, 2
          %s1644 = sadd.s32 %s28, %s1643
          %s1645 = smul.addr %s1644, 64
          %s1646 = scalar_lea.hbm %s10, %s1645
          %s1648 = sshll.u32 %s1636, 4
          %s1649 = int_to_ptr.vmem [resolvable:$true] %s1648
          %1651 = dma.vmem_to_hbm [thread:$0]  %s1649, 64, %s1646, %s1633
        $region68: #{tpu_custom_call.1} parent=59 // pred_fallthru
          _
      $region60: #{tpu_custom_call.1} parent=5 // pred_fallthru
        _
      %p1652 = scmp.le.s32.totalorder 2, %s19
      // Predicated region
      $region69: #{tpu_custom_call.1} parent=5 // pred_check
        %p1653 = pneg %p1652
      $region70: #{tpu_custom_call.1} parent=5 // pred_check_branch
        %1655 = sbr.rel (%p1653) target = $region72
      $region71: #{tpu_custom_call.1} parent=5 // pred_region
        %s1656 = ssub.s32 %s19, 2
        // Predicated region
        $region73: #{tpu_custom_call.1} parent=71 // pred_check
          %p1657 = pneg %p312
        $region74: #{tpu_custom_call.1} parent=71 // pred_check_branch
          %1659 = sbr.rel (%p1657) target = $region76
        $region75: #{tpu_custom_call.1} parent=71 // pred_region
          %s1660 = sand.u32 %s297, 1
          %s1661 = scalar_lea.sflag [#allocation4], %s1660
          %s1662 = sand.u32 %s297, 1
          %s1663 = smul.addr %s1662, 4
          %s1664 = scalar_lea.vmem [#allocation3], %s1663
          %1665 = dma.done %s1661, 64
        $region76: #{tpu_custom_call.1} parent=71 // pred_fallthru
          _
      $region72: #{tpu_custom_call.1} parent=5 // pred_fallthru
        _
    $region6: #{tpu_custom_call.1} parent=1 // loop_footer
      %s23 = sadd.s32 1, %s19
    $region7: #{tpu_custom_call.1} parent=1 // loop_footer_branch
      %18 = sbr.rel target = $region3
    $region8: #{tpu_custom_call.1} parent=1 // loop_exit
      _
    %1666 = vsyncpa [#allocation4], 1
    %s1667 = scalar_lea.sflag [#allocation4], 1
    %1668 = vsyncpa %s1667, 1

</llo_original>
